<compile_context>
chip_gen: v6e
topology: v6e:2x2x1
jax: 0.10.0
libtpu: 0.0.40
codegen_flags: <defaults>
</compile_context>

<pallas_src>
import jax
import jax.numpy as jnp
from jax import lax
from jax.experimental import pallas as pl
from jax.experimental.pallas import tpu as pltpu

EPS = 1e-3


def fused_mul_conv_bn_kernel(x_ref, s_ref, w_ref, g_ref, b_ref, o_ref):
    # x_ref: (P, Cin)   s_ref: (1, Cin)   w_ref: (tc, Cin)
    # g_ref/b_ref: (1, tc)                o_ref: (P, tc)   (lane-dense)
    xs = x_ref[...] * s_ref[...]                               # VPU broadcast mul

    # 1x1 conv as A @ B^T: contract Cin (the lane axis of both operands),
    # Cout on the result lane axis -> lane-dense MXU work and stores.
    y = lax.dot_general(
        xs, w_ref[...],
        dimension_numbers=(((1,), (1,)), ((), ())),
        preferred_element_type=jnp.float32)                    # (P, tc)

    # BatchNorm2d (training mode): biased batch stats over N*H*W, which is the
    # sublane axis here.  Two-pass variance (y is resident, so this is cheap
    # and avoids the E[y^2]-mean^2 cancellation issue).  Stats are per-lane
    # (= per output channel), so padded rows cannot leak across channels.
    inv_p = 1.0 / y.shape[0]
    mean = jnp.sum(y, axis=0, keepdims=True) * inv_p           # (1, tc)
    var = jnp.sum(jnp.square(y - mean), axis=0, keepdims=True) * inv_p
    scale = g_ref[...] * lax.rsqrt(var + EPS)
    shift = b_ref[...] - mean * scale
    o_ref[...] = (y * scale + shift).astype(o_ref.dtype)


def _default_cout_blocks(cout):
    """2-way Cout split pipelines the weight DMA (v5e) / feeds both TensorCores
    (v7x); on single-core v6e the per-step grid overhead outweighs it."""
    try:
        kind = jax.devices()[0].device_kind.lower()
    except Exception:
        kind = ""
    if "v6" in kind:
        return 1
    if cout % 2 == 0 and (cout // 2) % 8 == 0:
        return 2
    return 1


def module_forward(x473, x468, conv_w, gamma, beta, *, cout_blocks=None):
    """x473: (N, Cin, 1, 1), x468: (N, Cin, H, W), conv_w: (Cout, Cin, 1, 1)."""
    N, Cin, H, W = x468.shape
    Cout = conv_w.shape[0]
    # Per-sample scale + BN batch stats for N > 1 would need a different
    # blocking; the module is defined at N == 1.
    assert N == 1, "kernel assumes batch size 1"
    P = H * W

    if cout_blocks is None:
        cout_blocks = _default_cout_blocks(Cout)
    assert Cout % cout_blocks == 0
    tc = Cout // cout_blocks

    # Small (0.36 MB) activation transpose so the matmul's moving operand is
    # already (P, Cin); the 2.2 MB weight keeps its natural layout.  All other
    # reshapes below are free (contiguous) for NCHW data at N == 1.
    x_t = x468.reshape(Cin, P).T                 # (P, Cin)
    s_row = x473.reshape(1, Cin)                 # (1, Cin)
    w3 = conv_w.reshape(cout_blocks, tc, Cin)    # (blocks, tc, Cin)
    g3 = gamma.reshape(cout_blocks, 1, tc)
    b3 = beta.reshape(cout_blocks, 1, tc)

    cost = pl.CostEstimate(
        flops=2 * Cout * Cin * P,
        transcendentals=0,
        bytes_accessed=4 * (P * Cin + Cin + Cout * Cin + 2 * Cout + Cout * P))

    out3 = pl.pallas_call(
        fused_mul_conv_bn_kernel,
        out_shape=jax.ShapeDtypeStruct((cout_blocks, P, tc), jnp.float32),
        grid_spec=pltpu.PrefetchScalarGridSpec(
            num_scalar_prefetch=0,
            grid=(cout_blocks,),
            in_specs=[
                pl.BlockSpec((P, Cin), lambda i: (0, 0)),            # x^T (resident)
                pl.BlockSpec((1, Cin), lambda i: (0, 0)),            # scale (resident)
                pl.BlockSpec((None, tc, Cin), lambda i: (i, 0, 0)),  # W (split over Cout)
                pl.BlockSpec((None, 1, tc), lambda i: (i, 0, 0)),    # gamma
                pl.BlockSpec((None, 1, tc), lambda i: (i, 0, 0)),    # beta
            ],
            out_specs=pl.BlockSpec((None, P, tc), lambda i: (i, 0, 0)),
        ),
        # TODO(synk): on v7x verify in xprof that the "parallel" axis maps to
        # both TensorCores; if it runs as a 2-step loop on one TC, switch to
        # pltpu.CORE_PARALLEL / pl.core_map.
        compiler_params=pltpu.CompilerParams(
            dimension_semantics=("parallel",)),
        cost_estimate=cost,
    )(x_t, s_row, w3, g3, b3)

    # (blocks, P, tc) -> (Cout, P) -> NCHW.  ~60 KB transpose, negligible.
    return jnp.transpose(out3, (0, 2, 1)).reshape(N, Cout, H, W)


def reference_forward(x473, x468, conv_w, gamma, beta):
    x474 = x473 * x468
    x475 = lax.conv_general_dilated(
        x474, conv_w, window_strides=(1, 1), padding="VALID",
        dimension_numbers=("NCHW", "OIHW", "NCHW"))
    mean = jnp.mean(x475, axis=(0, 2, 3), keepdims=True)
    var = jnp.mean(jnp.square(x475 - mean), axis=(0, 2, 3), keepdims=True)
    x_hat = (x475 - mean) * lax.rsqrt(var + EPS)
    return x_hat * gamma.reshape(1, -1, 1, 1) + beta.reshape(1, -1, 1, 1)


if __name__ == "__main__":
    N, Cin, Cout, H, W = 1, 1824, 304, 7, 7

    key = jax.random.PRNGKey(0)
    k_x468, k_x473, k_w = jax.random.split(key, 3)

    x468 = jax.random.normal(k_x468, (N, Cin, H, W), dtype=jnp.float32)
    x473 = jax.random.normal(k_x473, (N, Cin, 1, 1), dtype=jnp.float32)
    # Conv2d weight (kaiming-ish scale), deterministic.  BN: gamma=1, beta=0
    # (PyTorch default init).
    conv_w = jax.random.normal(k_w, (Cout, Cin, 1, 1), dtype=jnp.float32) * (1.0 / (Cin ** 0.5))
    gamma = jnp.ones((Cout,), dtype=jnp.float32)
    beta = jnp.zeros((Cout,), dtype=jnp.float32)

    out = module_forward(x473, x468, conv_w, gamma, beta)
    out = jax.block_until_ready(out)

    ref = reference_forward(x473, x468, conv_w, gamma, beta)
    assert out.shape == (N, Cout, H, W), out.shape
    assert jnp.allclose(out, ref, atol=1e-3, rtol=1e-3), float(jnp.max(jnp.abs(out - ref)))

    print("KERNEL_OK")
</pallas_src>

<mosaic_0001>
module attributes {stable_mosaic.version = 11 : i64} {
  func.func @fused_mul_conv_bn_kernel(%arg0: i32, %arg1: memref<49x1824xf32, #tpu.memory_space<vmem>>, %arg2: memref<1x1824xf32, #tpu.memory_space<vmem>>, %arg3: memref<1x152x1824xf32, #tpu.memory_space<vmem>>, %arg4: memref<1x1x152xf32, #tpu.memory_space<vmem>>, %arg5: memref<1x1x152xf32, #tpu.memory_space<vmem>>, %arg6: memref<1x49x152xf32, #tpu.memory_space<vmem>>) attributes {dimension_semantics = [#tpu.dimension_semantics<parallel>], iteration_bounds = array<i64: 2>, scalar_prefetch = 0 : i64, scratch_operands = 0 : i64, tpu.core_type = #tpu.core_type<tc>, window_params = [{pipeline_mode = #tpu.pipeline_mode<synchronous>, transform_indices = @transform_0, window_bounds = array<i64: 49, 1824>}, {pipeline_mode = #tpu.pipeline_mode<synchronous>, transform_indices = @transform_1, window_bounds = array<i64: 1, 1824>}, {transform_indices = @transform_2, window_bounds = array<i64: 1, 152, 1824>}, {transform_indices = @transform_3, window_bounds = array<i64: 1, 1, 152>}, {transform_indices = @transform_4, window_bounds = array<i64: 1, 1, 152>}, {transform_indices = @transform_5, window_bounds = array<i64: 1, 49, 152>}]} {
    %c0 = arith.constant 0 : index
    %c0_0 = arith.constant 0 : index
    %0 = vector.load %arg1[%c0, %c0_0] : memref<49x1824xf32, #tpu.memory_space<vmem>>, vector<49x1824xf32>
    %c0_1 = arith.constant 0 : index
    %c0_2 = arith.constant 0 : index
    %1 = vector.load %arg2[%c0_1, %c0_2] : memref<1x1824xf32, #tpu.memory_space<vmem>>, vector<1x1824xf32>
    %2 = vector.broadcast %1 : vector<1x1824xf32> to vector<49x1824xf32>
    %3 = arith.mulf %0, %2 : vector<49x1824xf32>
    %c0_3 = arith.constant 0 : index
    %c0_4 = arith.constant 0 : index
    %c0_5 = arith.constant 0 : index
    %4 = vector.load %arg3[%c0_3, %c0_4, %c0_5] : memref<1x152x1824xf32, #tpu.memory_space<vmem>>, vector<1x152x1824xf32>
    %5 = vector.shape_cast %4 : vector<1x152x1824xf32> to vector<152x1824xf32>
    %cst = arith.constant dense<0.000000e+00> : vector<49x152xf32>
    %6 = tpu.matmul %3, %5, %cst {dimension_numbers = #tpu.dot_dimension_numbers<[1], [1], [0], [0], [0, 0, 1, 0], [], []>} : vector<49x1824xf32>, vector<152x1824xf32>, vector<49x152xf32> -> vector<49x152xf32>
    %cst_6 = arith.constant dense<0.000000e+00> : vector<152xf32>
    %7 = vector.multi_reduction <add>, %6, %cst_6 [0] : vector<49x152xf32> to vector<152xf32>
    %8 = vector.shape_cast %7 : vector<152xf32> to vector<1x152xf32>
    %cst_7 = arith.constant 0.0204081628 : f32
    %9 = vector.broadcast %cst_7 : f32 to vector<1x152xf32>
    %10 = arith.mulf %8, %9 : vector<1x152xf32>
    %11 = vector.broadcast %10 : vector<1x152xf32> to vector<49x152xf32>
    %12 = arith.subf %6, %11 : vector<49x152xf32>
    %13 = arith.mulf %12, %12 : vector<49x152xf32>
    %cst_8 = arith.constant dense<0.000000e+00> : vector<152xf32>
    %14 = vector.multi_reduction <add>, %13, %cst_8 [0] : vector<49x152xf32> to vector<152xf32>
    %15 = vector.shape_cast %14 : vector<152xf32> to vector<1x152xf32>
    %cst_9 = arith.constant 0.0204081628 : f32
    %16 = vector.broadcast %cst_9 : f32 to vector<1x152xf32>
    %17 = arith.mulf %15, %16 : vector<1x152xf32>
    %c0_10 = arith.constant 0 : index
    %c0_11 = arith.constant 0 : index
    %c0_12 = arith.constant 0 : index
    %18 = vector.load %arg4[%c0_10, %c0_11, %c0_12] : memref<1x1x152xf32, #tpu.memory_space<vmem>>, vector<1x1x152xf32>
    %19 = vector.shape_cast %18 : vector<1x1x152xf32> to vector<1x152xf32>
    %cst_13 = arith.constant 1.000000e-03 : f32
    %20 = vector.broadcast %cst_13 : f32 to vector<1x152xf32>
    %21 = arith.addf %17, %20 : vector<1x152xf32>
    %22 = math.rsqrt %21 : vector<1x152xf32>
    %23 = arith.mulf %19, %22 : vector<1x152xf32>
    %c0_14 = arith.constant 0 : index
    %c0_15 = arith.constant 0 : index
    %c0_16 = arith.constant 0 : index
    %24 = vector.load %arg5[%c0_14, %c0_15, %c0_16] : memref<1x1x152xf32, #tpu.memory_space<vmem>>, vector<1x1x152xf32>
    %25 = vector.shape_cast %24 : vector<1x1x152xf32> to vector<1x152xf32>
    %26 = arith.mulf %10, %23 : vector<1x152xf32>
    %27 = arith.subf %25, %26 : vector<1x152xf32>
    %28 = vector.broadcast %23 : vector<1x152xf32> to vector<49x152xf32>
    %29 = arith.mulf %6, %28 : vector<49x152xf32>
    %30 = vector.broadcast %27 : vector<1x152xf32> to vector<49x152xf32>
    %31 = arith.addf %29, %30 : vector<49x152xf32>
    %c0_17 = arith.constant 0 : index
    %c0_18 = arith.constant 0 : index
    %c0_19 = arith.constant 0 : index
    %32 = vector.load %arg6[%c0_17, %c0_18, %c0_19] : memref<1x49x152xf32, #tpu.memory_space<vmem>>, vector<1x49x152xf32>
    %33 = vector.shape_cast %32 : vector<1x49x152xf32> to vector<49x152xf32>
    %34 = vector.shape_cast %31 : vector<49x152xf32> to vector<1x49x152xf32>
    tpu.vector_store %arg6[%c0_17, %c0_18, %c0_19], %34 {strides = array<i32>} : memref<1x49x152xf32, #tpu.memory_space<vmem>>, vector<1x49x152xf32>,
    return
  }
  func.func @transform_0(%arg0: i32) -> (i32, i32) {
    %c0_i32 = arith.constant 0 : i32
    %c0_i32_0 = arith.constant 0 : i32
    %c0_i32_1 = arith.constant 0 : i32
    return %c0_i32, %c0_i32_0 : i32, i32
  }
  func.func @transform_1(%arg0: i32) -> (i32, i32) {
    %c0_i32 = arith.constant 0 : i32
    %c0_i32_0 = arith.constant 0 : i32
    %c0_i32_1 = arith.constant 0 : i32
    return %c0_i32, %c0_i32_0 : i32, i32
  }
  func.func @transform_2(%arg0: i32) -> (i32, i32, i32) {
    %c0_i32 = arith.constant 0 : i32
    %c0_i32_0 = arith.constant 0 : i32
    %c0_i32_1 = arith.constant 0 : i32
    return %arg0, %c0_i32, %c0_i32_0 : i32, i32, i32
  }
  func.func @transform_3(%arg0: i32) -> (i32, i32, i32) {
    %c0_i32 = arith.constant 0 : i32
    %c0_i32_0 = arith.constant 0 : i32
    %c0_i32_1 = arith.constant 0 : i32
    return %arg0, %c0_i32, %c0_i32_0 : i32, i32, i32
  }
  func.func @transform_4(%arg0: i32) -> (i32, i32, i32) {
    %c0_i32 = arith.constant 0 : i32
    %c0_i32_0 = arith.constant 0 : i32
    %c0_i32_1 = arith.constant 0 : i32
    return %arg0, %c0_i32, %c0_i32_0 : i32, i32, i32
  }
  func.func @transform_5(%arg0: i32) -> (i32, i32, i32) {
    %c0_i32 = arith.constant 0 : i32
    %c0_i32_0 = arith.constant 0 : i32
    %c0_i32_1 = arith.constant 0 : i32
    return %arg0, %c0_i32, %c0_i32_0 : i32, i32, i32
  }
}

</mosaic_0001>

<llo_original>
// kernel: tpu_custom_call.1
$region0: #{tpu_custom_call.1}
  #allocation0 [shape = 'u32[]', space=smem, size = 0x4, offset = 0x4, fixed_abs, tag = 'smem constant byte address 0x4 - core index']
  #allocation1 [shape = 'u32[144,128]{1,0:T(1,128)}', space=vmem, size = 0x12000, scoped, tag = 'internal scratch']
  %s0 = inlined_call_operand.hbm [shape: f32[49,1824], index: 0, kind: input, shape index: {}]
  %s1 = inlined_call_operand.hbm [shape: f32[1,1824], index: 1, kind: input, shape index: {}]
  %s2 = inlined_call_operand.hbm [shape: f32[2,152,1824], index: 2, kind: input, shape index: {}]
  %s3 = inlined_call_operand.hbm [shape: f32[2,1,152], index: 3, kind: input, shape index: {}]
  %s4 = inlined_call_operand.hbm [shape: f32[2,1,152], index: 4, kind: input, shape index: {}]
  %s5 = inlined_call_operand.vmem [shape: f32[2,49,152], index: 5, kind: output, shape index: {}]
  %s6 = sld [smem:[#allocation0]]
  $region73: #{tpu_custom_call.1} parent=0
    _
  %s8 = ssub.s32 1, %s6
  %s9 = scalar_select 0, %s8, %s6
  $region1: #{tpu_custom_call.1} parent=0
    #allocation2 [shape = 'u8[430080]{0}', space=vmem, size = 0x69000, scoped, tag = 'input window, operand 0, single buffered']
    #allocation3 [shape = 's32[2]{0}', space=sflag, size = 0x8, scoped, tag = 'scoped memory for tpu_custom_call.1']
    #allocation4 [shape = 'u8[7680]{0}', space=vmem, size = 0x2000, scoped, tag = 'input window, operand 1, single buffered']
    #allocation5 [shape = 's32[1]{0}', space=sflag, size = 0x4, scoped, tag = 'scoped memory for tpu_custom_call.1']
    #allocation6 [shape = 'u8[2334720]{0}', space=vmem, size = 0x23a000, scoped, tag = 'input window, operand 2']
    #allocation7 [shape = 'u8[2048]{0}', space=vmem, size = 0x800, scoped, tag = 'input window, operand 3']
    #allocation8 [shape = 'u8[2048]{0}', space=vmem, size = 0x800, scoped, tag = 'input window, operand 4']
    %10 = vsyncpa [#allocation3], 0
    %11 = vsyncpa [#allocation5], 0
    loop: start=0, step=1, limit=4
    $region2: #{tpu_custom_call.1} parent=1 // loop_pre_header
      _
    $region3: #{tpu_custom_call.1} parent=1 // loop_header
      %s13 = sphi 0, %s17
      %p14 = scmp.ge.s32.totalorder %s13, 4
      %s21 = sphi 0, %s21
      %s23 = sphi 0, %s21
      %s24 = sphi 0, %s23
      %s38 = sphi 0, %s24
      %s42 = sphi 0, %s42
      %s44 = sphi 0, %s42
      %s45 = sphi 0, %s44
      %s59 = sphi 0, %s45
      %s65 = sphi 0, %s67
      %s68 = sphi 0, %s65
      %s69 = sphi 0, %s68
      %s85 = sphi 0, %s69
      %s91 = sphi 0, %s93
      %s94 = sphi 0, %s91
      %s95 = sphi 0, %s94
      %s111 = sphi 0, %s95
      %s117 = sphi 0, %s119
      %s120 = sphi 0, %s117
      %s121 = sphi 0, %s120
      %s137 = sphi 0, %s121
      %s143 = sphi 0, %s145
      %s146 = sphi 0, %s143
      %s147 = sphi 0, %s146
      %s163 = sphi 0, %s147
    $region4: #{tpu_custom_call.1} parent=1 // loop_header_branch
      %16 = sbr.rel (%p14) target = $region8
    $region5: #{tpu_custom_call.1} parent=1 // loop_body
      %s18 = ssub.s32 %s13, 1
      %s19 = ssub.s32 %s13, 2
      %s20 = sadd.s32 %s13, 1
      %s22 = sadd.s32 %s21, 1
      %p25 = scmp.eq.s32.totalorder %s13, 1
      %p26 = scmp.ne.s32.totalorder %s21, %s23
      %p27 = scmp.eq.s32.totalorder %s13, 0
      %p28 = por %p26, %p27
      %p29 = scmp.ne.s32.totalorder %s21, %s23
      %p30 = scmp.eq.s32.totalorder %s18, 1
      %p31 = por %p29, %p30
      %p32 = scmp.ne.s32.totalorder %s23, %s24
      %p33 = scmp.eq.s32.totalorder %s18, 0
      %p34 = por %p32, %p33
      %p35 = scmp.ne.s32.totalorder %s23, %s24
      %p36 = scmp.eq.s32.totalorder %s19, 1
      %p37 = por %p35, %p36
      %p39 = scmp.ne.s32.totalorder %s24, %s38
      %p40 = scmp.eq.s32.totalorder %s19, 0
      %p41 = por %p39, %p40
      %s43 = sadd.s32 %s42, 1
      %p46 = scmp.eq.s32.totalorder %s13, 1
      %p47 = scmp.ne.s32.totalorder %s42, %s44
      %p48 = scmp.eq.s32.totalorder %s13, 0
      %p49 = por %p47, %p48
      %p50 = scmp.ne.s32.totalorder %s42, %s44
      %p51 = scmp.eq.s32.totalorder %s18, 1
      %p52 = por %p50, %p51
      %p53 = scmp.ne.s32.totalorder %s44, %s45
      %p54 = scmp.eq.s32.totalorder %s18, 0
      %p55 = por %p53, %p54
      %p56 = scmp.ne.s32.totalorder %s44, %s45
      %p57 = scmp.eq.s32.totalorder %s19, 1
      %p58 = por %p56, %p57
      %p60 = scmp.ne.s32.totalorder %s45, %s59
      %p61 = scmp.eq.s32.totalorder %s19, 0
      %p62 = por %p60, %p61
      %s63 = ssub.s32 %s13, %s20
      %p64 = scmp.eq.s32.totalorder %s63, 0
      %s66 = sadd.s32 %s65, 1
      %s67 = scalar_select %p64, %s65, %s66
      %p70 = pneg %p64
      %p71 = scmp.eq.s32.totalorder %s13, 1
      %p72 = por %p70, %p71
      %p73 = scmp.ne.s32.totalorder %s65, %s68
      %p74 = scmp.eq.s32.totalorder %s13, 0
      %p75 = por %p73, %p74
      %p76 = scmp.ne.s32.totalorder %s65, %s68
      %p77 = scmp.eq.s32.totalorder %s18, 1
      %p78 = por %p76, %p77
      %p79 = scmp.ne.s32.totalorder %s68, %s69
      %p80 = scmp.eq.s32.totalorder %s18, 0
      %p81 = por %p79, %p80
      %p82 = scmp.ne.s32.totalorder %s68, %s69
      %p83 = scmp.eq.s32.totalorder %s19, 1
      %p84 = por %p82, %p83
      %p86 = scmp.ne.s32.totalorder %s69, %s85
      %p87 = scmp.eq.s32.totalorder %s19, 0
      %p88 = por %p86, %p87
      %s89 = ssub.s32 %s13, %s20
      %p90 = scmp.eq.s32.totalorder %s89, 0
      %s92 = sadd.s32 %s91, 1
      %s93 = scalar_select %p90, %s91, %s92
      %p96 = pneg %p90
      %p97 = scmp.eq.s32.totalorder %s13, 1
      %p98 = por %p96, %p97
      %p99 = scmp.ne.s32.totalorder %s91, %s94
      %p100 = scmp.eq.s32.totalorder %s13, 0
      %p101 = por %p99, %p100
      %p102 = scmp.ne.s32.totalorder %s91, %s94
      %p103 = scmp.eq.s32.totalorder %s18, 1
      %p104 = por %p102, %p103
      %p105 = scmp.ne.s32.totalorder %s94, %s95
      %p106 = scmp.eq.s32.totalorder %s18, 0
      %p107 = por %p105, %p106
      %p108 = scmp.ne.s32.totalorder %s94, %s95
      %p109 = scmp.eq.s32.totalorder %s19, 1
      %p110 = por %p108, %p109
      %p112 = scmp.ne.s32.totalorder %s95, %s111
      %p113 = scmp.eq.s32.totalorder %s19, 0
      %p114 = por %p112, %p113
      %s115 = ssub.s32 %s13, %s20
      %p116 = scmp.eq.s32.totalorder %s115, 0
      %s118 = sadd.s32 %s117, 1
      %s119 = scalar_select %p116, %s117, %s118
      %p122 = pneg %p116
      %p123 = scmp.eq.s32.totalorder %s13, 1
      %p124 = por %p122, %p123
      %p125 = scmp.ne.s32.totalorder %s117, %s120
      %p126 = scmp.eq.s32.totalorder %s13, 0
      %p127 = por %p125, %p126
      %p128 = scmp.ne.s32.totalorder %s117, %s120
      %p129 = scmp.eq.s32.totalorder %s18, 1
      %p130 = por %p128, %p129
      %p131 = scmp.ne.s32.totalorder %s120, %s121
      %p132 = scmp.eq.s32.totalorder %s18, 0
      %p133 = por %p131, %p132
      %p134 = scmp.ne.s32.totalorder %s120, %s121
      %p135 = scmp.eq.s32.totalorder %s19, 1
      %p136 = por %p134, %p135
      %p138 = scmp.ne.s32.totalorder %s121, %s137
      %p139 = scmp.eq.s32.totalorder %s19, 0
      %p140 = por %p138, %p139
      %s141 = ssub.s32 %s13, %s20
      %p142 = scmp.eq.s32.totalorder %s141, 0
      %s144 = sadd.s32 %s143, 1
      %s145 = scalar_select %p142, %s143, %s144
      %p148 = pneg %p142
      %p149 = scmp.eq.s32.totalorder %s13, 1
      %p150 = por %p148, %p149
      %p151 = scmp.ne.s32.totalorder %s143, %s146
      %p152 = scmp.eq.s32.totalorder %s13, 0
      %p153 = por %p151, %p152
      %p154 = scmp.ne.s32.totalorder %s143, %s146
      %p155 = scmp.eq.s32.totalorder %s18, 1
      %p156 = por %p154, %p155
      %p157 = scmp.ne.s32.totalorder %s146, %s147
      %p158 = scmp.eq.s32.totalorder %s18, 0
      %p159 = por %p157, %p158
      %p160 = scmp.ne.s32.totalorder %s146, %s147
      %p161 = scmp.eq.s32.totalorder %s19, 1
      %p162 = por %p160, %p161
      %p164 = scmp.ne.s32.totalorder %s147, %s163
      %p165 = scmp.eq.s32.totalorder %s19, 0
      %p166 = por %p164, %p165
      %p167 = scmp.le.s32.totalorder 1, %s13
      %p168 = scmp.lt.s32.totalorder %s13, 3
      %p169 = pnand %p167, %p168
      %p170 = pneg %p169
      // Predicated region
      $region9: #{tpu_custom_call.1} parent=5 // pred_check
        _
      $region10: #{tpu_custom_call.1} parent=5 // pred_check_branch
        %172 = sbr.rel (%p169) target = $region12
      $region11: #{tpu_custom_call.1} parent=5 // pred_region
        %s173 = ssub.s32 %s13, 1
        // Predicated region
        $region13: #{tpu_custom_call.1} parent=11 // pred_check
          %p174 = pneg %p34
        $region14: #{tpu_custom_call.1} parent=11 // pred_check_branch
          %176 = sbr.rel (%p174) target = $region16
        $region15: #{tpu_custom_call.1} parent=11 // pred_region
          %s178 = ssub.s32 13440, 13440
          %179 = vsyncadd [#allocation3], %s178
          %s180 = sshll.u32 [#allocation2], 4
          %s181 = int_to_ptr.vmem [resolvable:$true] %s180
          %186 = dma.hbm_to_vmem [thread:$0]  %s0, 13440, %s181, [#allocation3], 1920, 1920, 120
        $region16: #{tpu_custom_call.1} parent=11 // pred_fallthru
          _
        // Predicated region
        $region17: #{tpu_custom_call.1} parent=11 // pred_check
          %p187 = pneg %p55
        $region18: #{tpu_custom_call.1} parent=11 // pred_check_branch
          %189 = sbr.rel (%p187) target = $region20
        $region19: #{tpu_custom_call.1} parent=11 // pred_region
          %s191 = ssub.s32 240, 240
          %192 = vsyncadd [#allocation5], %s191
          %s194 = sshll.u32 [#allocation4], 4
          %s195 = int_to_ptr.vmem [resolvable:$true] %s194
          %197 = dma.hbm_to_vmem [thread:$0]  %s1, 240, %s195, [#allocation5]
        $region20: #{tpu_custom_call.1} parent=11 // pred_fallthru
          _
      $region12: #{tpu_custom_call.1} parent=5 // pred_fallthru
        _
      %p198 = scmp.lt.s32.totalorder %s13, 2
      // Predicated region
      $region21: #{tpu_custom_call.1} parent=5 // pred_check
        %p199 = pneg %p198
      $region22: #{tpu_custom_call.1} parent=5 // pred_check_branch
        %201 = sbr.rel (%p199) target = $region24
      $region23: #{tpu_custom_call.1} parent=5 // pred_region
        // Predicated region
        $region25: #{tpu_custom_call.1} parent=23 // pred_check
          %p202 = pneg %p75
        $region26: #{tpu_custom_call.1} parent=23 // pred_check_branch
          %204 = sbr.rel (%p202) target = $region28
        $region27: #{tpu_custom_call.1} parent=23 // pred_region
          %s205 = sand.u32 %s13, 1
          %s206 = scalar_lea.sflag [#allocation3], %s205
          %s207 = sand.u32 %s65, 1
          %s208 = smul.addr %s207, 2280
          %s209 = scalar_lea.vmem [#allocation6], %s208
          %s211 = ssub.s32 36480, 36480
          %212 = vsyncadd %s206, %s211
          %s213 = smul.addr %s13, 285
          %s214 = smul.addr %s213, 128
          %s215 = scalar_lea.hbm %s2, %s214
          %s216 = sshll.u32 %s209, 4
          %s217 = int_to_ptr.vmem [resolvable:$true] %s216
          %222 = dma.hbm_to_vmem [thread:$0]  %s215, 36480, %s217, %s206, 1920, 1920, 120
        $region28: #{tpu_custom_call.1} parent=23 // pred_fallthru
          _
        // Predicated region
        $region29: #{tpu_custom_call.1} parent=23 // pred_check
          %p223 = pneg %p101
        $region30: #{tpu_custom_call.1} parent=23 // pred_check_branch
          %225 = sbr.rel (%p223) target = $region32
        $region31: #{tpu_custom_call.1} parent=23 // pred_region
          %s226 = sand.u32 %s13, 1
          %s227 = scalar_lea.sflag [#allocation3], %s226
          %s228 = sand.u32 %s91, 1
          %s229 = smul.addr %s228, 2
          %s230 = scalar_lea.vmem [#allocation7], %s229
          %s232 = ssub.s32 32, 32
          %233 = vsyncadd %s227, %s232
          %s234 = smul.addr %s13, 2
          %s235 = smul.addr %s234, 16
          %s236 = scalar_lea.hbm %s3, %s235
          %s238 = sshll.u32 %s230, 4
          %s239 = int_to_ptr.vmem [resolvable:$true] %s238
          %241 = dma.hbm_to_vmem [thread:$0]  %s236, 32, %s239, %s227
        $region32: #{tpu_custom_call.1} parent=23 // pred_fallthru
          _
        // Predicated region
        $region33: #{tpu_custom_call.1} parent=23 // pred_check
          %p242 = pneg %p127
        $region34: #{tpu_custom_call.1} parent=23 // pred_check_branch
          %244 = sbr.rel (%p242) target = $region36
        $region35: #{tpu_custom_call.1} parent=23 // pred_region
          %s245 = sand.u32 %s13, 1
          %s246 = scalar_lea.sflag [#allocation3], %s245
          %s247 = sand.u32 %s117, 1
          %s248 = smul.addr %s247, 2
          %s249 = scalar_lea.vmem [#allocation8], %s248
          %s251 = ssub.s32 32, 32
          %252 = vsyncadd %s246, %s251
          %s253 = smul.addr %s13, 2
          %s254 = smul.addr %s253, 16
          %s255 = scalar_lea.hbm %s4, %s254
          %s257 = sshll.u32 %s249, 4
          %s258 = int_to_ptr.vmem [resolvable:$true] %s257
          %260 = dma.hbm_to_vmem [thread:$0]  %s255, 32, %s258, %s246
        $region36: #{tpu_custom_call.1} parent=23 // pred_fallthru
          _
      $region24: #{tpu_custom_call.1} parent=5 // pred_fallthru
        _
      %p261 = scmp.le.s32.totalorder 1, %s13
      %p262 = scmp.lt.s32.totalorder %s13, 3
      %p263 = pnand %p261, %p262
      %p264 = pneg %p263
      // Predicated region
      $region37: #{tpu_custom_call.1} parent=5 // pred_check
        _
      $region38: #{tpu_custom_call.1} parent=5 // pred_check_branch
        %266 = sbr.rel (%p263) target = $region40
      $region39: #{tpu_custom_call.1} parent=5 // pred_region
        %s267 = ssub.s32 %s13, 1
        // Predicated region
        $region41: #{tpu_custom_call.1} parent=39 // pred_check
          %p268 = pneg %p34
        $region42: #{tpu_custom_call.1} parent=39 // pred_check_branch
          %270 = sbr.rel (%p268) target = $region44
        $region43: #{tpu_custom_call.1} parent=39 // pred_region
          %271 = dma.done [#allocation3], 13440
        $region44: #{tpu_custom_call.1} parent=39 // pred_fallthru
          _
        // Predicated region
        $region45: #{tpu_custom_call.1} parent=39 // pred_check
          %p272 = pneg %p55
        $region46: #{tpu_custom_call.1} parent=39 // pred_check_branch
          %274 = sbr.rel (%p272) target = $region48
        $region47: #{tpu_custom_call.1} parent=39 // pred_region
          %275 = dma.done [#allocation5], 240
        $region48: #{tpu_custom_call.1} parent=39 // pred_fallthru
          _
        %s276 = sand.u32 %s18, 1
        %s277 = scalar_lea.sflag [#allocation3], %s276
        %s278 = sand.u32 %s68, 1
        %s279 = smul.addr %s278, 2280
        %s280 = scalar_lea.vmem [#allocation6], %s279
        // Predicated region
        $region49: #{tpu_custom_call.1} parent=39 // pred_check
          %p281 = pneg %p81
        $region50: #{tpu_custom_call.1} parent=39 // pred_check_branch
          %283 = sbr.rel (%p281) target = $region52
        $region51: #{tpu_custom_call.1} parent=39 // pred_region
          %284 = dma.done %s277, 36480
        $region52: #{tpu_custom_call.1} parent=39 // pred_fallthru
          _
        %s285 = sand.u32 %s18, 1
        %s286 = scalar_lea.sflag [#allocation3], %s285
        %s287 = sand.u32 %s94, 1
        %s288 = smul.addr %s287, 2
        %s289 = scalar_lea.vmem [#allocation7], %s288
        // Predicated region
        $region53: #{tpu_custom_call.1} parent=39 // pred_check
          %p290 = pneg %p107
        $region54: #{tpu_custom_call.1} parent=39 // pred_check_branch
          %292 = sbr.rel (%p290) target = $region56
        $region55: #{tpu_custom_call.1} parent=39 // pred_region
          %293 = dma.done %s286, 32
        $region56: #{tpu_custom_call.1} parent=39 // pred_fallthru
          _
        %s294 = sand.u32 %s18, 1
        %s295 = scalar_lea.sflag [#allocation3], %s294
        %s296 = sand.u32 %s120, 1
        %s297 = smul.addr %s296, 2
        %s298 = scalar_lea.vmem [#allocation8], %s297
        // Predicated region
        $region57: #{tpu_custom_call.1} parent=39 // pred_check
          %p299 = pneg %p133
        $region58: #{tpu_custom_call.1} parent=39 // pred_check_branch
          %301 = sbr.rel (%p299) target = $region60
        $region59: #{tpu_custom_call.1} parent=39 // pred_region
          %302 = dma.done %s295, 32
        $region60: #{tpu_custom_call.1} parent=39 // pred_fallthru
          _
        %p303 = pneg %p34
        %p304 = pneg %p31
        %p305 = pneg %p55
        %p306 = pneg %p52
        %s307 = sand.u32 %s18, 1
        %s308 = scalar_lea.sflag [#allocation3], %s307
        %s309 = sand.u32 %s68, 1
        %s310 = smul.addr %s309, 2280
        %s311 = scalar_lea.vmem [#allocation6], %s310
        %p312 = pneg %p81
        %p313 = pneg %p78
        %s314 = sand.u32 %s18, 1
        %s315 = scalar_lea.sflag [#allocation3], %s314
        %s316 = sand.u32 %s94, 1
        %s317 = smul.addr %s316, 2
        %s318 = scalar_lea.vmem [#allocation7], %s317
        %p319 = pneg %p107
        %p320 = pneg %p104
        %s321 = sand.u32 %s18, 1
        %s322 = scalar_lea.sflag [#allocation3], %s321
        %s323 = sand.u32 %s120, 1
        %s324 = smul.addr %s323, 2
        %s325 = scalar_lea.vmem [#allocation8], %s324
        %p326 = pneg %p133
        %p327 = pneg %p130
        %p328 = pneg %p159
        %p329 = pneg %p156
        %p330 = scmp.lt.s32.totalorder %s18, 1
        %s331 = scalar_select %p330, %s18, 1
        %s332 = smul.addr %s331, 14
        %s333 = smul.addr %s332, 8
        %s334 = scalar_lea.vmem %s5, %s333
        %p335 = scmp.lt.s32.totalorder %s18, 1
        %s336 = scalar_select %p335, %s18, 1
        %s337 = smul.addr %s336, 14
        %s338 = smul.addr %s337, 8
        %s339 = scalar_lea.vmem %s5, %s338
        %v340 = vld [vmem:[#allocation2] sm:$0xff]
        %v341 = vld [vmem:[#allocation2 + $0x8] sm:$0xff]
        %v342 = vld [vmem:[#allocation2 + $0x10] sm:$0xff]
        %v343 = vld [vmem:[#allocation2 + $0x18] sm:$0xff]
        %v344 = vld [vmem:[#allocation2 + $0x20] sm:$0xff]
        %v345 = vld [vmem:[#allocation2 + $0x28] sm:$0xff]
        %v346 = vld [vmem:[#allocation2 + $0x30] sm:$0xff]
        %v347 = vld [vmem:[#allocation2 + $0x38] sm:$0xff]
        %v348 = vld [vmem:[#allocation2 + $0x40] sm:$0xff]
        %v349 = vld [vmem:[#allocation2 + $0x48] sm:$0xff]
        %v350 = vld [vmem:[#allocation2 + $0x50] sm:$0xff]
        %v351 = vld [vmem:[#allocation2 + $0x58] sm:$0xff]
        %v352 = vld [vmem:[#allocation2 + $0x60] sm:$0xff]
        %v353 = vld [vmem:[#allocation2 + $0x68] sm:$0xff]
        %v354 = vld [vmem:[#allocation2 + $0x70] sm:$0xff]
        %v355 = vld [vmem:[#allocation2 + $0x78] sm:$0xff]
        %v356 = vld [vmem:[#allocation2 + $0x80] sm:$0xff]
        %v357 = vld [vmem:[#allocation2 + $0x88] sm:$0xff]
        %v358 = vld [vmem:[#allocation2 + $0x90] sm:$0xff]
        %v359 = vld [vmem:[#allocation2 + $0x98] sm:$0xff]
        %v360 = vld [vmem:[#allocation2 + $0xa0] sm:$0xff]
        %v361 = vld [vmem:[#allocation2 + $0xa8] sm:$0xff]
        %v362 = vld [vmem:[#allocation2 + $0xb0] sm:$0xff]
        %v363 = vld [vmem:[#allocation2 + $0xb8] sm:$0xff]
        %v364 = vld [vmem:[#allocation2 + $0xc0] sm:$0xff]
        %v365 = vld [vmem:[#allocation2 + $0xc8] sm:$0xff]
        %v366 = vld [vmem:[#allocation2 + $0xd0] sm:$0xff]
        %v367 = vld [vmem:[#allocation2 + $0xd8] sm:$0xff]
        %v368 = vld [vmem:[#allocation2 + $0xe0] sm:$0xff]
        %v369 = vld [vmem:[#allocation2 + $0xe8] sm:$0xff]
        %v370 = vld [vmem:[#allocation2 + $0xf0] sm:$0xff]
        %v371 = vld [vmem:[#allocation2 + $0xf8] sm:$0xff]
        %v372 = vld [vmem:[#allocation2 + $0x100] sm:$0xff]
        %v373 = vld [vmem:[#allocation2 + $0x108] sm:$0xff]
        %v374 = vld [vmem:[#allocation2 + $0x110] sm:$0xff]
        %v375 = vld [vmem:[#allocation2 + $0x118] sm:$0xff]
        %v376 = vld [vmem:[#allocation2 + $0x120] sm:$0xff]
        %v377 = vld [vmem:[#allocation2 + $0x128] sm:$0xff]
        %v378 = vld [vmem:[#allocation2 + $0x130] sm:$0xff]
        %v379 = vld [vmem:[#allocation2 + $0x138] sm:$0xff]
        %v380 = vld [vmem:[#allocation2 + $0x140] sm:$0xff]
        %v381 = vld [vmem:[#allocation2 + $0x148] sm:$0xff]
        %v382 = vld [vmem:[#allocation2 + $0x150] sm:$0xff]
        %v383 = vld [vmem:[#allocation2 + $0x158] sm:$0xff]
        %v384 = vld [vmem:[#allocation2 + $0x160] sm:$0xff]
        %v385 = vld [vmem:[#allocation2 + $0x168] sm:$0xff]
        %v386 = vld [vmem:[#allocation2 + $0x170] sm:$0xff]
        %v387 = vld [vmem:[#allocation2 + $0x178] sm:$0xff]
        %v388 = vld [vmem:[#allocation2 + $0x180] sm:$0xff]
        %v389 = vld [vmem:[#allocation2 + $0x188] sm:$0xff]
        %v390 = vld [vmem:[#allocation2 + $0x190] sm:$0xff]
        %v391 = vld [vmem:[#allocation2 + $0x198] sm:$0xff]
        %v392 = vld [vmem:[#allocation2 + $0x1a0] sm:$0xff]
        %v393 = vld [vmem:[#allocation2 + $0x1a8] sm:$0xff]
        %v394 = vld [vmem:[#allocation2 + $0x1b0] sm:$0xff]
        %v395 = vld [vmem:[#allocation2 + $0x1b8] sm:$0xff]
        %v396 = vld [vmem:[#allocation2 + $0x1c0] sm:$0xff]
        %v397 = vld [vmem:[#allocation2 + $0x1c8] sm:$0xff]
        %v398 = vld [vmem:[#allocation2 + $0x1d0] sm:$0xff]
        %v399 = vld [vmem:[#allocation2 + $0x1d8] sm:$0xff]
        %v400 = vld [vmem:[#allocation2 + $0x1e0] sm:$0xff]
        %v401 = vld [vmem:[#allocation2 + $0x1e8] sm:$0xff]
        %v402 = vld [vmem:[#allocation2 + $0x1f0] sm:$0xff]
        %v403 = vld [vmem:[#allocation2 + $0x1f8] sm:$0xff]
        %v404 = vld [vmem:[#allocation2 + $0x200] sm:$0xff]
        %v405 = vld [vmem:[#allocation2 + $0x208] sm:$0xff]
        %v406 = vld [vmem:[#allocation2 + $0x210] sm:$0xff]
        %v407 = vld [vmem:[#allocation2 + $0x218] sm:$0xff]
        %v408 = vld [vmem:[#allocation2 + $0x220] sm:$0xff]
        %v409 = vld [vmem:[#allocation2 + $0x228] sm:$0xff]
        %v410 = vld [vmem:[#allocation2 + $0x230] sm:$0xff]
        %v411 = vld [vmem:[#allocation2 + $0x238] sm:$0xff]
        %v412 = vld [vmem:[#allocation2 + $0x240] sm:$0xff]
        %v413 = vld [vmem:[#allocation2 + $0x248] sm:$0xff]
        %v414 = vld [vmem:[#allocation2 + $0x250] sm:$0xff]
        %v415 = vld [vmem:[#allocation2 + $0x258] sm:$0xff]
        %v416 = vld [vmem:[#allocation2 + $0x260] sm:$0xff]
        %v417 = vld [vmem:[#allocation2 + $0x268] sm:$0xff]
        %v418 = vld [vmem:[#allocation2 + $0x270] sm:$0xff]
        %v419 = vld [vmem:[#allocation2 + $0x278] sm:$0xff]
        %v420 = vld [vmem:[#allocation2 + $0x280] sm:$0xff]
        %v421 = vld [vmem:[#allocation2 + $0x288] sm:$0xff]
        %v422 = vld [vmem:[#allocation2 + $0x290] sm:$0xff]
        %v423 = vld [vmem:[#allocation2 + $0x298] sm:$0xff]
        %v424 = vld [vmem:[#allocation2 + $0x2a0] sm:$0xff]
        %v425 = vld [vmem:[#allocation2 + $0x2a8] sm:$0xff]
        %v426 = vld [vmem:[#allocation2 + $0x2b0] sm:$0xff]
        %v427 = vld [vmem:[#allocation2 + $0x2b8] sm:$0xff]
        %v428 = vld [vmem:[#allocation2 + $0x2c0] sm:$0xff]
        %v429 = vld [vmem:[#allocation2 + $0x2c8] sm:$0xff]
        %v430 = vld [vmem:[#allocation2 + $0x2d0] sm:$0x1]
        %v431 = vld [vmem:[#allocation2 + $0x2d8] sm:$0x1]
        %v432 = vld [vmem:[#allocation2 + $0x2e0] sm:$0x1]
        %v433 = vld [vmem:[#allocation2 + $0x2e8] sm:$0x1]
        %v434 = vld [vmem:[#allocation2 + $0x2f0] sm:$0x1]
        %v435 = vld [vmem:[#allocation2 + $0x2f8] sm:$0x1]
        %v436 = vld [vmem:[#allocation2 + $0x300] sm:$0x1]
        %v437 = vld [vmem:[#allocation2 + $0x308] sm:$0x1]
        %v438 = vld [vmem:[#allocation2 + $0x310] sm:$0x1]
        %v439 = vld [vmem:[#allocation2 + $0x318] sm:$0x1]
        %v440 = vld [vmem:[#allocation2 + $0x320] sm:$0x1]
        %v441 = vld [vmem:[#allocation2 + $0x328] sm:$0x1]
        %v442 = vld [vmem:[#allocation2 + $0x330] sm:$0x1]
        %v443 = vld [vmem:[#allocation2 + $0x338] sm:$0x1]
        %v444 = vld [vmem:[#allocation2 + $0x340] sm:$0x1]
        %v445 = vld [vmem:[#allocation4] sm:$0xff]
        %v446 = vld [vmem:[#allocation4 + $0x8] sm:$0x7f]
        %v449 = vlaneseq
        %v450 = vshrl.u32 %v449, 7
        %v451 = vsub.s32 0, %v450
        %v452 = vrot.slane %v445, %v451
        %v453 = vlaneseq
        %v454 = vshrl.u32 %v453, 7
        %v455 = vsub.s32 1, %v454
        %v456 = vrot.slane %v445, %v455
        %v457 = vlaneseq
        %v458 = vshrl.u32 %v457, 7
        %v459 = vsub.s32 2, %v458
        %v460 = vrot.slane %v445, %v459
        %v461 = vlaneseq
        %v462 = vshrl.u32 %v461, 7
        %v463 = vsub.s32 3, %v462
        %v464 = vrot.slane %v445, %v463
        %v465 = vlaneseq
        %v466 = vshrl.u32 %v465, 7
        %v467 = vsub.s32 4, %v466
        %v468 = vrot.slane %v445, %v467
        %v469 = vlaneseq
        %v470 = vshrl.u32 %v469, 7
        %v471 = vsub.s32 5, %v470
        %v472 = vrot.slane %v445, %v471
        %v473 = vlaneseq
        %v474 = vshrl.u32 %v473, 7
        %v475 = vsub.s32 6, %v474
        %v476 = vrot.slane %v445, %v475
        %v477 = vlaneseq
        %v478 = vshrl.u32 %v477, 7
        %v479 = vsub.s32 7, %v478
        %v480 = vrot.slane %v445, %v479
        %v481 = vlaneseq
        %v482 = vshrl.u32 %v481, 7
        %v483 = vsub.s32 0, %v482
        %v484 = vrot.slane %v446, %v483
        %v485 = vlaneseq
        %v486 = vshrl.u32 %v485, 7
        %v487 = vsub.s32 1, %v486
        %v488 = vrot.slane %v446, %v487
        %v489 = vlaneseq
        %v490 = vshrl.u32 %v489, 7
        %v491 = vsub.s32 2, %v490
        %v492 = vrot.slane %v446, %v491
        %v493 = vlaneseq
        %v494 = vshrl.u32 %v493, 7
        %v495 = vsub.s32 3, %v494
        %v496 = vrot.slane %v446, %v495
        %v497 = vlaneseq
        %v498 = vshrl.u32 %v497, 7
        %v499 = vsub.s32 4, %v498
        %v500 = vrot.slane %v446, %v499
        %v501 = vlaneseq
        %v502 = vshrl.u32 %v501, 7
        %v503 = vsub.s32 5, %v502
        %v504 = vrot.slane %v446, %v503
        %v505 = vlaneseq
        %v506 = vshrl.u32 %v505, 7
        %v507 = vsub.s32 6, %v506
        %v508 = vrot.slane %v446, %v507
        %v524 = vmul.f32 %v340, %v452
        %v525 = vmul.f32 %v341, %v456
        %v526 = vmul.f32 %v342, %v460
        %v527 = vmul.f32 %v343, %v464
        %v528 = vmul.f32 %v344, %v468
        %v529 = vmul.f32 %v345, %v472
        %v530 = vmul.f32 %v346, %v476
        %v531 = vmul.f32 %v347, %v480
        %v532 = vmul.f32 %v348, %v484
        %v533 = vmul.f32 %v349, %v488
        %v534 = vmul.f32 %v350, %v492
        %v535 = vmul.f32 %v351, %v496
        %v536 = vmul.f32 %v352, %v500
        %v537 = vmul.f32 %v353, %v504
        %v538 = vmul.f32 %v354, %v508
        %v539 = vmul.f32 %v355, %v452
        %v540 = vmul.f32 %v356, %v456
        %v541 = vmul.f32 %v357, %v460
        %v542 = vmul.f32 %v358, %v464
        %v543 = vmul.f32 %v359, %v468
        %v544 = vmul.f32 %v360, %v472
        %v545 = vmul.f32 %v361, %v476
        %v546 = vmul.f32 %v362, %v480
        %v547 = vmul.f32 %v363, %v484
        %v548 = vmul.f32 %v364, %v488
        %v549 = vmul.f32 %v365, %v492
        %v550 = vmul.f32 %v366, %v496
        %v551 = vmul.f32 %v367, %v500
        %v552 = vmul.f32 %v368, %v504
        %v553 = vmul.f32 %v369, %v508
        %v554 = vmul.f32 %v370, %v452
        %v555 = vmul.f32 %v371, %v456
        %v556 = vmul.f32 %v372, %v460
        %v557 = vmul.f32 %v373, %v464
        %v558 = vmul.f32 %v374, %v468
        %v559 = vmul.f32 %v375, %v472
        %v560 = vmul.f32 %v376, %v476
        %v561 = vmul.f32 %v377, %v480
        %v562 = vmul.f32 %v378, %v484
        %v563 = vmul.f32 %v379, %v488
        %v564 = vmul.f32 %v380, %v492
        %v565 = vmul.f32 %v381, %v496
        %v566 = vmul.f32 %v382, %v500
        %v567 = vmul.f32 %v383, %v504
        %v568 = vmul.f32 %v384, %v508
        %v569 = vmul.f32 %v385, %v452
        %v570 = vmul.f32 %v386, %v456
        %v571 = vmul.f32 %v387, %v460
        %v572 = vmul.f32 %v388, %v464
        %v573 = vmul.f32 %v389, %v468
        %v574 = vmul.f32 %v390, %v472
        %v575 = vmul.f32 %v391, %v476
        %v576 = vmul.f32 %v392, %v480
        %v577 = vmul.f32 %v393, %v484
        %v578 = vmul.f32 %v394, %v488
        %v579 = vmul.f32 %v395, %v492
        %v580 = vmul.f32 %v396, %v496
        %v581 = vmul.f32 %v397, %v500
        %v582 = vmul.f32 %v398, %v504
        %v583 = vmul.f32 %v399, %v508
        %v584 = vmul.f32 %v400, %v452
        %v585 = vmul.f32 %v401, %v456
        %v586 = vmul.f32 %v402, %v460
        %v587 = vmul.f32 %v403, %v464
        %v588 = vmul.f32 %v404, %v468
        %v589 = vmul.f32 %v405, %v472
        %v590 = vmul.f32 %v406, %v476
        %v591 = vmul.f32 %v407, %v480
        %v592 = vmul.f32 %v408, %v484
        %v593 = vmul.f32 %v409, %v488
        %v594 = vmul.f32 %v410, %v492
        %v595 = vmul.f32 %v411, %v496
        %v596 = vmul.f32 %v412, %v500
        %v597 = vmul.f32 %v413, %v504
        %v598 = vmul.f32 %v414, %v508
        %v599 = vmul.f32 %v415, %v452
        %v600 = vmul.f32 %v416, %v456
        %v601 = vmul.f32 %v417, %v460
        %v602 = vmul.f32 %v418, %v464
        %v603 = vmul.f32 %v419, %v468
        %v604 = vmul.f32 %v420, %v472
        %v605 = vmul.f32 %v421, %v476
        %v606 = vmul.f32 %v422, %v480
        %v607 = vmul.f32 %v423, %v484
        %v608 = vmul.f32 %v424, %v488
        %v609 = vmul.f32 %v425, %v492
        %v610 = vmul.f32 %v426, %v496
        %v611 = vmul.f32 %v427, %v500
        %v612 = vmul.f32 %v428, %v504
        %v613 = vmul.f32 %v429, %v508
        %v614 = vmul.f32 %v430, %v452
        %v615 = vmul.f32 %v431, %v456
        %v616 = vmul.f32 %v432, %v460
        %v617 = vmul.f32 %v433, %v464
        %v618 = vmul.f32 %v434, %v468
        %v619 = vmul.f32 %v435, %v472
        %v620 = vmul.f32 %v436, %v476
        %v621 = vmul.f32 %v437, %v480
        %v622 = vmul.f32 %v438, %v484
        %v623 = vmul.f32 %v439, %v488
        %v624 = vmul.f32 %v440, %v492
        %v625 = vmul.f32 %v441, %v496
        %v626 = vmul.f32 %v442, %v500
        %v627 = vmul.f32 %v443, %v504
        %v628 = vmul.f32 %v444, %v508
        %v629 = vld [vmem:[%s280] sm:$0xff]
        %v630 = vld [vmem:[%s280 + $0x8] sm:$0xff]
        %v631 = vld [vmem:[%s280 + $0x10] sm:$0xff]
        %v632 = vld [vmem:[%s280 + $0x18] sm:$0xff]
        %v633 = vld [vmem:[%s280 + $0x20] sm:$0xff]
        %v634 = vld [vmem:[%s280 + $0x28] sm:$0xff]
        %v635 = vld [vmem:[%s280 + $0x30] sm:$0xff]
        %v636 = vld [vmem:[%s280 + $0x38] sm:$0xff]
        %v637 = vld [vmem:[%s280 + $0x40] sm:$0xff]
        %v638 = vld [vmem:[%s280 + $0x48] sm:$0xff]
        %v639 = vld [vmem:[%s280 + $0x50] sm:$0xff]
        %v640 = vld [vmem:[%s280 + $0x58] sm:$0xff]
        %v641 = vld [vmem:[%s280 + $0x60] sm:$0xff]
        %v642 = vld [vmem:[%s280 + $0x68] sm:$0xff]
        %v643 = vld [vmem:[%s280 + $0x70] sm:$0xff]
        %v644 = vld [vmem:[%s280 + $0x78] sm:$0xff]
        %v645 = vld [vmem:[%s280 + $0x80] sm:$0xff]
        %v646 = vld [vmem:[%s280 + $0x88] sm:$0xff]
        %v647 = vld [vmem:[%s280 + $0x90] sm:$0xff]
        %v648 = vld [vmem:[%s280 + $0x98] sm:$0xff]
        %v649 = vld [vmem:[%s280 + $0xa0] sm:$0xff]
        %v650 = vld [vmem:[%s280 + $0xa8] sm:$0xff]
        %v651 = vld [vmem:[%s280 + $0xb0] sm:$0xff]
        %v652 = vld [vmem:[%s280 + $0xb8] sm:$0xff]
        %v653 = vld [vmem:[%s280 + $0xc0] sm:$0xff]
        %v654 = vld [vmem:[%s280 + $0xc8] sm:$0xff]
        %v655 = vld [vmem:[%s280 + $0xd0] sm:$0xff]
        %v656 = vld [vmem:[%s280 + $0xd8] sm:$0xff]
        %v657 = vld [vmem:[%s280 + $0xe0] sm:$0xff]
        %v658 = vld [vmem:[%s280 + $0xe8] sm:$0xff]
        %v659 = vld [vmem:[%s280 + $0xf0] sm:$0xff]
        %v660 = vld [vmem:[%s280 + $0xf8] sm:$0xff]
        %v661 = vld [vmem:[%s280 + $0x100] sm:$0xff]
        %v662 = vld [vmem:[%s280 + $0x108] sm:$0xff]
        %v663 = vld [vmem:[%s280 + $0x110] sm:$0xff]
        %v664 = vld [vmem:[%s280 + $0x118] sm:$0xff]
        %v665 = vld [vmem:[%s280 + $0x120] sm:$0xff]
        %v666 = vld [vmem:[%s280 + $0x128] sm:$0xff]
        %v667 = vld [vmem:[%s280 + $0x130] sm:$0xff]
        %v668 = vld [vmem:[%s280 + $0x138] sm:$0xff]
        %v669 = vld [vmem:[%s280 + $0x140] sm:$0xff]
        %v670 = vld [vmem:[%s280 + $0x148] sm:$0xff]
        %v671 = vld [vmem:[%s280 + $0x150] sm:$0xff]
        %v672 = vld [vmem:[%s280 + $0x158] sm:$0xff]
        %v673 = vld [vmem:[%s280 + $0x160] sm:$0xff]
        %v674 = vld [vmem:[%s280 + $0x168] sm:$0xff]
        %v675 = vld [vmem:[%s280 + $0x170] sm:$0xff]
        %v676 = vld [vmem:[%s280 + $0x178] sm:$0xff]
        %v677 = vld [vmem:[%s280 + $0x180] sm:$0xff]
        %v678 = vld [vmem:[%s280 + $0x188] sm:$0xff]
        %v679 = vld [vmem:[%s280 + $0x190] sm:$0xff]
        %v680 = vld [vmem:[%s280 + $0x198] sm:$0xff]
        %v681 = vld [vmem:[%s280 + $0x1a0] sm:$0xff]
        %v682 = vld [vmem:[%s280 + $0x1a8] sm:$0xff]
        %v683 = vld [vmem:[%s280 + $0x1b0] sm:$0xff]
        %v684 = vld [vmem:[%s280 + $0x1b8] sm:$0xff]
        %v685 = vld [vmem:[%s280 + $0x1c0] sm:$0xff]
        %v686 = vld [vmem:[%s280 + $0x1c8] sm:$0xff]
        %v687 = vld [vmem:[%s280 + $0x1d0] sm:$0xff]
        %v688 = vld [vmem:[%s280 + $0x1d8] sm:$0xff]
        %v689 = vld [vmem:[%s280 + $0x1e0] sm:$0xff]
        %v690 = vld [vmem:[%s280 + $0x1e8] sm:$0xff]
        %v691 = vld [vmem:[%s280 + $0x1f0] sm:$0xff]
        %v692 = vld [vmem:[%s280 + $0x1f8] sm:$0xff]
        %v693 = vld [vmem:[%s280 + $0x200] sm:$0xff]
        %v694 = vld [vmem:[%s280 + $0x208] sm:$0xff]
        %v695 = vld [vmem:[%s280 + $0x210] sm:$0xff]
        %v696 = vld [vmem:[%s280 + $0x218] sm:$0xff]
        %v697 = vld [vmem:[%s280 + $0x220] sm:$0xff]
        %v698 = vld [vmem:[%s280 + $0x228] sm:$0xff]
        %v699 = vld [vmem:[%s280 + $0x230] sm:$0xff]
        %v700 = vld [vmem:[%s280 + $0x238] sm:$0xff]
        %v701 = vld [vmem:[%s280 + $0x240] sm:$0xff]
        %v702 = vld [vmem:[%s280 + $0x248] sm:$0xff]
        %v703 = vld [vmem:[%s280 + $0x250] sm:$0xff]
        %v704 = vld [vmem:[%s280 + $0x258] sm:$0xff]
        %v705 = vld [vmem:[%s280 + $0x260] sm:$0xff]
        %v706 = vld [vmem:[%s280 + $0x268] sm:$0xff]
        %v707 = vld [vmem:[%s280 + $0x270] sm:$0xff]
        %v708 = vld [vmem:[%s280 + $0x278] sm:$0xff]
        %v709 = vld [vmem:[%s280 + $0x280] sm:$0xff]
        %v710 = vld [vmem:[%s280 + $0x288] sm:$0xff]
        %v711 = vld [vmem:[%s280 + $0x290] sm:$0xff]
        %v712 = vld [vmem:[%s280 + $0x298] sm:$0xff]
        %v713 = vld [vmem:[%s280 + $0x2a0] sm:$0xff]
        %v714 = vld [vmem:[%s280 + $0x2a8] sm:$0xff]
        %v715 = vld [vmem:[%s280 + $0x2b0] sm:$0xff]
        %v716 = vld [vmem:[%s280 + $0x2b8] sm:$0xff]
        %v717 = vld [vmem:[%s280 + $0x2c0] sm:$0xff]
        %v718 = vld [vmem:[%s280 + $0x2c8] sm:$0xff]
        %v719 = vld [vmem:[%s280 + $0x2d0] sm:$0xff]
        %v720 = vld [vmem:[%s280 + $0x2d8] sm:$0xff]
        %v721 = vld [vmem:[%s280 + $0x2e0] sm:$0xff]
        %v722 = vld [vmem:[%s280 + $0x2e8] sm:$0xff]
        %v723 = vld [vmem:[%s280 + $0x2f0] sm:$0xff]
        %v724 = vld [vmem:[%s280 + $0x2f8] sm:$0xff]
        %v725 = vld [vmem:[%s280 + $0x300] sm:$0xff]
        %v726 = vld [vmem:[%s280 + $0x308] sm:$0xff]
        %v727 = vld [vmem:[%s280 + $0x310] sm:$0xff]
        %v728 = vld [vmem:[%s280 + $0x318] sm:$0xff]
        %v729 = vld [vmem:[%s280 + $0x320] sm:$0xff]
        %v730 = vld [vmem:[%s280 + $0x328] sm:$0xff]
        %v731 = vld [vmem:[%s280 + $0x330] sm:$0xff]
        %v732 = vld [vmem:[%s280 + $0x338] sm:$0xff]
        %v733 = vld [vmem:[%s280 + $0x340] sm:$0xff]
        %v734 = vld [vmem:[%s280 + $0x348] sm:$0xff]
        %v735 = vld [vmem:[%s280 + $0x350] sm:$0xff]
        %v736 = vld [vmem:[%s280 + $0x358] sm:$0xff]
        %v737 = vld [vmem:[%s280 + $0x360] sm:$0xff]
        %v738 = vld [vmem:[%s280 + $0x368] sm:$0xff]
        %v739 = vld [vmem:[%s280 + $0x370] sm:$0xff]
        %v740 = vld [vmem:[%s280 + $0x378] sm:$0xff]
        %v741 = vld [vmem:[%s280 + $0x380] sm:$0xff]
        %v742 = vld [vmem:[%s280 + $0x388] sm:$0xff]
        %v743 = vld [vmem:[%s280 + $0x390] sm:$0xff]
        %v744 = vld [vmem:[%s280 + $0x398] sm:$0xff]
        %v745 = vld [vmem:[%s280 + $0x3a0] sm:$0xff]
        %v746 = vld [vmem:[%s280 + $0x3a8] sm:$0xff]
        %v747 = vld [vmem:[%s280 + $0x3b0] sm:$0xff]
        %v748 = vld [vmem:[%s280 + $0x3b8] sm:$0xff]
        %v749 = vld [vmem:[%s280 + $0x3c0] sm:$0xff]
        %v750 = vld [vmem:[%s280 + $0x3c8] sm:$0xff]
        %v751 = vld [vmem:[%s280 + $0x3d0] sm:$0xff]
        %v752 = vld [vmem:[%s280 + $0x3d8] sm:$0xff]
        %v753 = vld [vmem:[%s280 + $0x3e0] sm:$0xff]
        %v754 = vld [vmem:[%s280 + $0x3e8] sm:$0xff]
        %v755 = vld [vmem:[%s280 + $0x3f0] sm:$0xff]
        %v756 = vld [vmem:[%s280 + $0x3f8] sm:$0xff]
        %v757 = vld [vmem:[%s280 + $0x400] sm:$0xff]
        %v758 = vld [vmem:[%s280 + $0x408] sm:$0xff]
        %v759 = vld [vmem:[%s280 + $0x410] sm:$0xff]
        %v760 = vld [vmem:[%s280 + $0x418] sm:$0xff]
        %v761 = vld [vmem:[%s280 + $0x420] sm:$0xff]
        %v762 = vld [vmem:[%s280 + $0x428] sm:$0xff]
        %v763 = vld [vmem:[%s280 + $0x430] sm:$0xff]
        %v764 = vld [vmem:[%s280 + $0x438] sm:$0xff]
        %v765 = vld [vmem:[%s280 + $0x440] sm:$0xff]
        %v766 = vld [vmem:[%s280 + $0x448] sm:$0xff]
        %v767 = vld [vmem:[%s280 + $0x450] sm:$0xff]
        %v768 = vld [vmem:[%s280 + $0x458] sm:$0xff]
        %v769 = vld [vmem:[%s280 + $0x460] sm:$0xff]
        %v770 = vld [vmem:[%s280 + $0x468] sm:$0xff]
        %v771 = vld [vmem:[%s280 + $0x470] sm:$0xff]
        %v772 = vld [vmem:[%s280 + $0x478] sm:$0xff]
        %v773 = vld [vmem:[%s280 + $0x480] sm:$0xff]
        %v774 = vld [vmem:[%s280 + $0x488] sm:$0xff]
        %v775 = vld [vmem:[%s280 + $0x490] sm:$0xff]
        %v776 = vld [vmem:[%s280 + $0x498] sm:$0xff]
        %v777 = vld [vmem:[%s280 + $0x4a0] sm:$0xff]
        %v778 = vld [vmem:[%s280 + $0x4a8] sm:$0xff]
        %v779 = vld [vmem:[%s280 + $0x4b0] sm:$0xff]
        %v780 = vld [vmem:[%s280 + $0x4b8] sm:$0xff]
        %v781 = vld [vmem:[%s280 + $0x4c0] sm:$0xff]
        %v782 = vld [vmem:[%s280 + $0x4c8] sm:$0xff]
        %v783 = vld [vmem:[%s280 + $0x4d0] sm:$0xff]
        %v784 = vld [vmem:[%s280 + $0x4d8] sm:$0xff]
        %v785 = vld [vmem:[%s280 + $0x4e0] sm:$0xff]
        %v786 = vld [vmem:[%s280 + $0x4e8] sm:$0xff]
        %v787 = vld [vmem:[%s280 + $0x4f0] sm:$0xff]
        %v788 = vld [vmem:[%s280 + $0x4f8] sm:$0xff]
        %v789 = vld [vmem:[%s280 + $0x500] sm:$0xff]
        %v790 = vld [vmem:[%s280 + $0x508] sm:$0xff]
        %v791 = vld [vmem:[%s280 + $0x510] sm:$0xff]
        %v792 = vld [vmem:[%s280 + $0x518] sm:$0xff]
        %v793 = vld [vmem:[%s280 + $0x520] sm:$0xff]
        %v794 = vld [vmem:[%s280 + $0x528] sm:$0xff]
        %v795 = vld [vmem:[%s280 + $0x530] sm:$0xff]
        %v796 = vld [vmem:[%s280 + $0x538] sm:$0xff]
        %v797 = vld [vmem:[%s280 + $0x540] sm:$0xff]
        %v798 = vld [vmem:[%s280 + $0x548] sm:$0xff]
        %v799 = vld [vmem:[%s280 + $0x550] sm:$0xff]
        %v800 = vld [vmem:[%s280 + $0x558] sm:$0xff]
        %v801 = vld [vmem:[%s280 + $0x560] sm:$0xff]
        %v802 = vld [vmem:[%s280 + $0x568] sm:$0xff]
        %v803 = vld [vmem:[%s280 + $0x570] sm:$0xff]
        %v804 = vld [vmem:[%s280 + $0x578] sm:$0xff]
        %v805 = vld [vmem:[%s280 + $0x580] sm:$0xff]
        %v806 = vld [vmem:[%s280 + $0x588] sm:$0xff]
        %v807 = vld [vmem:[%s280 + $0x590] sm:$0xff]
        %v808 = vld [vmem:[%s280 + $0x598] sm:$0xff]
        %v809 = vld [vmem:[%s280 + $0x5a0] sm:$0xff]
        %v810 = vld [vmem:[%s280 + $0x5a8] sm:$0xff]
        %v811 = vld [vmem:[%s280 + $0x5b0] sm:$0xff]
        %v812 = vld [vmem:[%s280 + $0x5b8] sm:$0xff]
        %v813 = vld [vmem:[%s280 + $0x5c0] sm:$0xff]
        %v814 = vld [vmem:[%s280 + $0x5c8] sm:$0xff]
        %v815 = vld [vmem:[%s280 + $0x5d0] sm:$0xff]
        %v816 = vld [vmem:[%s280 + $0x5d8] sm:$0xff]
        %v817 = vld [vmem:[%s280 + $0x5e0] sm:$0xff]
        %v818 = vld [vmem:[%s280 + $0x5e8] sm:$0xff]
        %v819 = vld [vmem:[%s280 + $0x5f0] sm:$0xff]
        %v820 = vld [vmem:[%s280 + $0x5f8] sm:$0xff]
        %v821 = vld [vmem:[%s280 + $0x600] sm:$0xff]
        %v822 = vld [vmem:[%s280 + $0x608] sm:$0xff]
        %v823 = vld [vmem:[%s280 + $0x610] sm:$0xff]
        %v824 = vld [vmem:[%s280 + $0x618] sm:$0xff]
        %v825 = vld [vmem:[%s280 + $0x620] sm:$0xff]
        %v826 = vld [vmem:[%s280 + $0x628] sm:$0xff]
        %v827 = vld [vmem:[%s280 + $0x630] sm:$0xff]
        %v828 = vld [vmem:[%s280 + $0x638] sm:$0xff]
        %v829 = vld [vmem:[%s280 + $0x640] sm:$0xff]
        %v830 = vld [vmem:[%s280 + $0x648] sm:$0xff]
        %v831 = vld [vmem:[%s280 + $0x650] sm:$0xff]
        %v832 = vld [vmem:[%s280 + $0x658] sm:$0xff]
        %v833 = vld [vmem:[%s280 + $0x660] sm:$0xff]
        %v834 = vld [vmem:[%s280 + $0x668] sm:$0xff]
        %v835 = vld [vmem:[%s280 + $0x670] sm:$0xff]
        %v836 = vld [vmem:[%s280 + $0x678] sm:$0xff]
        %v837 = vld [vmem:[%s280 + $0x680] sm:$0xff]
        %v838 = vld [vmem:[%s280 + $0x688] sm:$0xff]
        %v839 = vld [vmem:[%s280 + $0x690] sm:$0xff]
        %v840 = vld [vmem:[%s280 + $0x698] sm:$0xff]
        %v841 = vld [vmem:[%s280 + $0x6a0] sm:$0xff]
        %v842 = vld [vmem:[%s280 + $0x6a8] sm:$0xff]
        %v843 = vld [vmem:[%s280 + $0x6b0] sm:$0xff]
        %v844 = vld [vmem:[%s280 + $0x6b8] sm:$0xff]
        %v845 = vld [vmem:[%s280 + $0x6c0] sm:$0xff]
        %v846 = vld [vmem:[%s280 + $0x6c8] sm:$0xff]
        %v847 = vld [vmem:[%s280 + $0x6d0] sm:$0xff]
        %v848 = vld [vmem:[%s280 + $0x6d8] sm:$0xff]
        %v849 = vld [vmem:[%s280 + $0x6e0] sm:$0xff]
        %v850 = vld [vmem:[%s280 + $0x6e8] sm:$0xff]
        %v851 = vld [vmem:[%s280 + $0x6f0] sm:$0xff]
        %v852 = vld [vmem:[%s280 + $0x6f8] sm:$0xff]
        %v853 = vld [vmem:[%s280 + $0x700] sm:$0xff]
        %v854 = vld [vmem:[%s280 + $0x708] sm:$0xff]
        %v855 = vld [vmem:[%s280 + $0x710] sm:$0xff]
        %v856 = vld [vmem:[%s280 + $0x718] sm:$0xff]
        %v857 = vld [vmem:[%s280 + $0x720] sm:$0xff]
        %v858 = vld [vmem:[%s280 + $0x728] sm:$0xff]
        %v859 = vld [vmem:[%s280 + $0x730] sm:$0xff]
        %v860 = vld [vmem:[%s280 + $0x738] sm:$0xff]
        %v861 = vld [vmem:[%s280 + $0x740] sm:$0xff]
        %v862 = vld [vmem:[%s280 + $0x748] sm:$0xff]
        %v863 = vld [vmem:[%s280 + $0x750] sm:$0xff]
        %v864 = vld [vmem:[%s280 + $0x758] sm:$0xff]
        %v865 = vld [vmem:[%s280 + $0x760] sm:$0xff]
        %v866 = vld [vmem:[%s280 + $0x768] sm:$0xff]
        %v867 = vld [vmem:[%s280 + $0x770] sm:$0xff]
        %v868 = vld [vmem:[%s280 + $0x778] sm:$0xff]
        %v869 = vld [vmem:[%s280 + $0x780] sm:$0xff]
        %v870 = vld [vmem:[%s280 + $0x788] sm:$0xff]
        %v871 = vld [vmem:[%s280 + $0x790] sm:$0xff]
        %v872 = vld [vmem:[%s280 + $0x798] sm:$0xff]
        %v873 = vld [vmem:[%s280 + $0x7a0] sm:$0xff]
        %v874 = vld [vmem:[%s280 + $0x7a8] sm:$0xff]
        %v875 = vld [vmem:[%s280 + $0x7b0] sm:$0xff]
        %v876 = vld [vmem:[%s280 + $0x7b8] sm:$0xff]
        %v877 = vld [vmem:[%s280 + $0x7c0] sm:$0xff]
        %v878 = vld [vmem:[%s280 + $0x7c8] sm:$0xff]
        %v879 = vld [vmem:[%s280 + $0x7d0] sm:$0xff]
        %v880 = vld [vmem:[%s280 + $0x7d8] sm:$0xff]
        %v881 = vld [vmem:[%s280 + $0x7e0] sm:$0xff]
        %v882 = vld [vmem:[%s280 + $0x7e8] sm:$0xff]
        %v883 = vld [vmem:[%s280 + $0x7f0] sm:$0xff]
        %v884 = vld [vmem:[%s280 + $0x7f8] sm:$0xff]
        %v885 = vld [vmem:[%s280 + $0x800] sm:$0xff]
        %v886 = vld [vmem:[%s280 + $0x808] sm:$0xff]
        %v887 = vld [vmem:[%s280 + $0x810] sm:$0xff]
        %v888 = vld [vmem:[%s280 + $0x818] sm:$0xff]
        %v889 = vld [vmem:[%s280 + $0x820] sm:$0xff]
        %v890 = vld [vmem:[%s280 + $0x828] sm:$0xff]
        %v891 = vld [vmem:[%s280 + $0x830] sm:$0xff]
        %v892 = vld [vmem:[%s280 + $0x838] sm:$0xff]
        %v893 = vld [vmem:[%s280 + $0x840] sm:$0xff]
        %v894 = vld [vmem:[%s280 + $0x848] sm:$0xff]
        %v895 = vld [vmem:[%s280 + $0x850] sm:$0xff]
        %v896 = vld [vmem:[%s280 + $0x858] sm:$0xff]
        %v897 = vld [vmem:[%s280 + $0x860] sm:$0xff]
        %v898 = vld [vmem:[%s280 + $0x868] sm:$0xff]
        %v899 = vld [vmem:[%s280 + $0x870] sm:$0xff]
        %v900 = vld [vmem:[%s280 + $0x878] sm:$0xff]
        %v901 = vld [vmem:[%s280 + $0x880] sm:$0xff]
        %v902 = vld [vmem:[%s280 + $0x888] sm:$0xff]
        %v903 = vld [vmem:[%s280 + $0x890] sm:$0xff]
        %v904 = vld [vmem:[%s280 + $0x898] sm:$0xff]
        %v905 = vld [vmem:[%s280 + $0x8a0] sm:$0xff]
        %v906 = vld [vmem:[%s280 + $0x8a8] sm:$0xff]
        %v907 = vld [vmem:[%s280 + $0x8b0] sm:$0xff]
        %v908 = vld [vmem:[%s280 + $0x8b8] sm:$0xff]
        %v909 = vld [vmem:[%s280 + $0x8c0] sm:$0xff]
        %v910 = vld [vmem:[%s280 + $0x8c8] sm:$0xff]
        %v911 = vld [vmem:[%s280 + $0x8d0] sm:$0xff]
        %v912 = vld [vmem:[%s280 + $0x8d8] sm:$0xff]
        %v913 = vld [vmem:[%s280 + $0x8e0] sm:$0xff]
        %vm914 = vcmask 261120
        %v916 = vsel %vm914, %v538, 0
        %v919 = vsel %vm914, %v553, 0
        %v922 = vsel %vm914, %v568, 0
        %v925 = vsel %vm914, %v583, 0
        %v928 = vsel %vm914, %v598, 0
        %v931 = vsel %vm914, %v613, 0
        %v934 = vsel %vm914, %v628, 0
        %v937 = vsel %vm914, %v643, 0
        %v940 = vsel %vm914, %v658, 0
        %v943 = vsel %vm914, %v673, 0
        %v946 = vsel %vm914, %v688, 0
        %v949 = vsel %vm914, %v703, 0
        %v952 = vsel %vm914, %v718, 0
        %v955 = vsel %vm914, %v733, 0
        %v958 = vsel %vm914, %v748, 0
        %v961 = vsel %vm914, %v763, 0
        %v964 = vsel %vm914, %v778, 0
        %v967 = vsel %vm914, %v793, 0
        %v970 = vsel %vm914, %v808, 0
        %v973 = vsel %vm914, %v823, 0
        %v976 = vsel %vm914, %v838, 0
        %v979 = vsel %vm914, %v853, 0
        %v982 = vsel %vm914, %v868, 0
        %v985 = vsel %vm914, %v883, 0
        %v988 = vsel %vm914, %v898, 0
        %v991 = vsel %vm914, %v913, 0
        %993 = vmatprep.subr.mxu0 %v855
        %994 = vmatpush1.xpose.msra.mxu0 %v854
        %995 = vmatprep.subr.mxu0 %v840
        %996 = vmatpush1.xpose.msra.mxu0 %v839
        %997 = vmatprep.subr.mxu0 %v825
        %998 = vmatpush1.xpose.msra.mxu0 %v824
        %999 = vmatprep.subr.mxu0 %v810
        %1000 = vmatpush1.xpose.msra.mxu0 %v809
        %1001 = vmatprep.subr.mxu0 %v795
        %1002 = vmatpush1.xpose.msra.mxu0 %v794
        %1003 = vmatprep.subr.mxu0 %v780
        %1004 = vmatpush1.xpose.msra.mxu0 %v779
        %1005 = vmatprep.subr.mxu0 %v765
        %1006 = vmatpush1.xpose.msra.mxu0 %v764
        %1007 = vmatprep.subr.mxu0 %v750
        %1008 = vmatpush1.xpose.msra.mxu0 %v749
        %1009 = vmatprep.subr.mxu0 %v735
        %1010 = vmatpush1.xpose.msra.mxu0 %v734
        %1011 = vmatprep.subr.mxu0 %v720
        %1012 = vmatpush1.xpose.msra.mxu0 %v719
        %1013 = vmatprep.subr.mxu0 %v705
        %1014 = vmatpush1.xpose.msra.mxu0 %v704
        %1015 = vmatprep.subr.mxu0 %v690
        %1016 = vmatpush1.xpose.msra.mxu0 %v689
        %1017 = vmatprep.subr.mxu0 %v675
        %1018 = vmatpush1.xpose.msra.mxu0 %v674
        %1019 = vmatprep.subr.mxu0 %v660
        %1020 = vmatpush1.xpose.msra.mxu0 %v659
        %1021 = vmatprep.subr.mxu0 %v645
        %1022 = vmatpush1.xpose.msra.mxu0 %v644
        %1023 = vmatprep.subr.mxu0 %v630
        %1024 = vmatpush1.xpose.msra.mxu0 %v629
        %1025 = vmatprep.subr.mxu0 0.0
        %1026 = vmatpush2.xpose.msra.mxu0 0.0
        %1027 = vmatprep.subr.mxu0 0.0
        %1028 = vmatpush2.xpose.msra.mxu0 0.0
        %1029 = vmatprep.subr.mxu0 0.0
        %1030 = vmatpush2.xpose.msra.mxu0 0.0
        %1031 = vmatprep.subr.mxu0 0.0
        %1032 = vmatpush2.xpose.msra.mxu0 0.0
        %1033 = vmatprep.subr.mxu0 0.0
        %1034 = vmatpush2.xpose.msra.mxu0 0.0
        %1035 = vmatprep.subr.mxu0 0.0
        %1036 = vmatpush2.xpose.msra.mxu0 0.0
        %1037 = vmatprep.subr.mxu0 0.0
        %1038 = vmatpush2.xpose.msra.mxu0 0.0
        %1039 = vmatprep.subr.mxu0 0.0
        %1040 = vmatpush2.xpose.msra.mxu0 0.0
        %1041 = vmatprep.subr.mxu0 0.0
        %1042 = vmatpush2.xpose.msra.mxu0 0.0
        %1043 = vmatprep.subr.mxu0 0.0
        %1044 = vmatpush2.xpose.msra.mxu0 0.0
        %1045 = vmatprep.subr.mxu0 0.0
        %1046 = vmatpush2.xpose.msra.mxu0 0.0
        %1047 = vmatprep.subr.mxu0 0.0
        %1048 = vmatpush2.xpose.msra.mxu0 0.0
        %1049 = vmatprep.subr.mxu0 0.0
        %1050 = vmatpush2.xpose.msra.mxu0 0.0
        %1051 = vmatprep.subr.mxu0 %v900
        %1052 = vmatpush2.xpose.msra.mxu0 %v899
        %1053 = vmatprep.subr.mxu0 %v885
        %1054 = vmatpush2.xpose.msra.mxu0 %v884
        %1055 = vmatprep.subr.mxu0 %v870
        %1056 = vmatpush2.xpose.msra.mxu0 %v869
        %1057 = vmatprep.mubr.f32.mxu0 %v525
        %1058 = vmatmul.mubr.f32.gmra.mxu0 %v524
        %v1059 = vpop.f32.mrf.mxu0
        %v1060 = vadd.f32 0.0, %v1059
        %v1061 = vpop.f32.mrf.mxu0
        %v1062 = vadd.f32 0.0, %v1061
        %1063 = vmatprep.mubr.f32.mxu0 %v540
        %1064 = vmatmul.mubr.f32.gmra.mxu0 %v539
        %v1065 = vpop.f32.mrf.mxu0
        %v1066 = vadd.f32 0.0, %v1065
        %v1067 = vpop.f32.mrf.mxu0
        %v1068 = vadd.f32 0.0, %v1067
        %1069 = vmatprep.mubr.f32.mxu0 %v555
        %1070 = vmatmul.mubr.f32.gmra.mxu0 %v554
        %v1071 = vpop.f32.mrf.mxu0
        %v1072 = vadd.f32 0.0, %v1071
        %v1073 = vpop.f32.mrf.mxu0
        %v1074 = vadd.f32 0.0, %v1073
        %1075 = vmatprep.mubr.f32.mxu0 %v570
        %1076 = vmatmul.mubr.f32.gmra.mxu0 %v569
        %v1077 = vpop.f32.mrf.mxu0
        %v1078 = vadd.f32 0.0, %v1077
        %v1079 = vpop.f32.mrf.mxu0
        %v1080 = vadd.f32 0.0, %v1079
        %1081 = vmatprep.mubr.f32.mxu0 %v585
        %1082 = vmatmul.mubr.f32.gmra.mxu0 %v584
        %v1083 = vpop.f32.mrf.mxu0
        %v1084 = vadd.f32 0.0, %v1083
        %v1085 = vpop.f32.mrf.mxu0
        %v1086 = vadd.f32 0.0, %v1085
        %1087 = vmatprep.mubr.f32.mxu0 %v600
        %1088 = vmatmul.mubr.f32.gmra.mxu0 %v599
        %v1089 = vpop.f32.mrf.mxu0
        %v1090 = vadd.f32 0.0, %v1089
        %v1091 = vpop.f32.mrf.mxu0
        %v1092 = vadd.f32 0.0, %v1091
        %1093 = vmatprep.mubr.f32.mxu0 %v615
        %1094 = vmatmul.mubr.f32.gmra.mxu0 %v614
        %v1095 = vpop.f32.mrf.mxu0
        %v1096 = vadd.f32 0.0, %v1095
        %v1097 = vpop.f32.mrf.mxu0
        %v1098 = vadd.f32 0.0, %v1097
        %1099 = vdwg.mxu0
        %1100 = vmatprep.subr.mxu0 %v857
        %1101 = vmatpush1.xpose.msra.mxu0 %v856
        %1102 = vmatprep.subr.mxu0 %v842
        %1103 = vmatpush1.xpose.msra.mxu0 %v841
        %1104 = vmatprep.subr.mxu0 %v827
        %1105 = vmatpush1.xpose.msra.mxu0 %v826
        %1106 = vmatprep.subr.mxu0 %v812
        %1107 = vmatpush1.xpose.msra.mxu0 %v811
        %1108 = vmatprep.subr.mxu0 %v797
        %1109 = vmatpush1.xpose.msra.mxu0 %v796
        %1110 = vmatprep.subr.mxu0 %v782
        %1111 = vmatpush1.xpose.msra.mxu0 %v781
        %1112 = vmatprep.subr.mxu0 %v767
        %1113 = vmatpush1.xpose.msra.mxu0 %v766
        %1114 = vmatprep.subr.mxu0 %v752
        %1115 = vmatpush1.xpose.msra.mxu0 %v751
        %1116 = vmatprep.subr.mxu0 %v737
        %1117 = vmatpush1.xpose.msra.mxu0 %v736
        %1118 = vmatprep.subr.mxu0 %v722
        %1119 = vmatpush1.xpose.msra.mxu0 %v721
        %1120 = vmatprep.subr.mxu0 %v707
        %1121 = vmatpush1.xpose.msra.mxu0 %v706
        %1122 = vmatprep.subr.mxu0 %v692
        %1123 = vmatpush1.xpose.msra.mxu0 %v691
        %1124 = vmatprep.subr.mxu0 %v677
        %1125 = vmatpush1.xpose.msra.mxu0 %v676
        %1126 = vmatprep.subr.mxu0 %v662
        %1127 = vmatpush1.xpose.msra.mxu0 %v661
        %1128 = vmatprep.subr.mxu0 %v647
        %1129 = vmatpush1.xpose.msra.mxu0 %v646
        %1130 = vmatprep.subr.mxu0 %v632
        %1131 = vmatpush1.xpose.msra.mxu0 %v631
        %1132 = vmatprep.subr.mxu0 0.0
        %1133 = vmatpush2.xpose.msra.mxu0 0.0
        %1134 = vmatprep.subr.mxu0 0.0
        %1135 = vmatpush2.xpose.msra.mxu0 0.0
        %1136 = vmatprep.subr.mxu0 0.0
        %1137 = vmatpush2.xpose.msra.mxu0 0.0
        %1138 = vmatprep.subr.mxu0 0.0
        %1139 = vmatpush2.xpose.msra.mxu0 0.0
        %1140 = vmatprep.subr.mxu0 0.0
        %1141 = vmatpush2.xpose.msra.mxu0 0.0
        %1142 = vmatprep.subr.mxu0 0.0
        %1143 = vmatpush2.xpose.msra.mxu0 0.0
        %1144 = vmatprep.subr.mxu0 0.0
        %1145 = vmatpush2.xpose.msra.mxu0 0.0
        %1146 = vmatprep.subr.mxu0 0.0
        %1147 = vmatpush2.xpose.msra.mxu0 0.0
        %1148 = vmatprep.subr.mxu0 0.0
        %1149 = vmatpush2.xpose.msra.mxu0 0.0
        %1150 = vmatprep.subr.mxu0 0.0
        %1151 = vmatpush2.xpose.msra.mxu0 0.0
        %1152 = vmatprep.subr.mxu0 0.0
        %1153 = vmatpush2.xpose.msra.mxu0 0.0
        %1154 = vmatprep.subr.mxu0 0.0
        %1155 = vmatpush2.xpose.msra.mxu0 0.0
        %1156 = vmatprep.subr.mxu0 0.0
        %1157 = vmatpush2.xpose.msra.mxu0 0.0
        %1158 = vmatprep.subr.mxu0 %v902
        %1159 = vmatpush2.xpose.msra.mxu0 %v901
        %1160 = vmatprep.subr.mxu0 %v887
        %1161 = vmatpush2.xpose.msra.mxu0 %v886
        %1162 = vmatprep.subr.mxu0 %v872
        %1163 = vmatpush2.xpose.msra.mxu0 %v871
        %1164 = vmatprep.mubr.f32.mxu0 %v527
        %1165 = vmatmul.mubr.f32.gmra.mxu0 %v526
        %v1166 = vpop.f32.mrf.mxu0
        %v1167 = vadd.f32 %v1060, %v1166
        %v1168 = vpop.f32.mrf.mxu0
        %v1169 = vadd.f32 %v1062, %v1168
        %1170 = vmatprep.mubr.f32.mxu0 %v542
        %1171 = vmatmul.mubr.f32.gmra.mxu0 %v541
        %v1172 = vpop.f32.mrf.mxu0
        %v1173 = vadd.f32 %v1066, %v1172
        %v1174 = vpop.f32.mrf.mxu0
        %v1175 = vadd.f32 %v1068, %v1174
        %1176 = vmatprep.mubr.f32.mxu0 %v557
        %1177 = vmatmul.mubr.f32.gmra.mxu0 %v556
        %v1178 = vpop.f32.mrf.mxu0
        %v1179 = vadd.f32 %v1072, %v1178
        %v1180 = vpop.f32.mrf.mxu0
        %v1181 = vadd.f32 %v1074, %v1180
        %1182 = vmatprep.mubr.f32.mxu0 %v572
        %1183 = vmatmul.mubr.f32.gmra.mxu0 %v571
        %v1184 = vpop.f32.mrf.mxu0
        %v1185 = vadd.f32 %v1078, %v1184
        %v1186 = vpop.f32.mrf.mxu0
        %v1187 = vadd.f32 %v1080, %v1186
        %1188 = vmatprep.mubr.f32.mxu0 %v587
        %1189 = vmatmul.mubr.f32.gmra.mxu0 %v586
        %v1190 = vpop.f32.mrf.mxu0
        %v1191 = vadd.f32 %v1084, %v1190
        %v1192 = vpop.f32.mrf.mxu0
        %v1193 = vadd.f32 %v1086, %v1192
        %1194 = vmatprep.mubr.f32.mxu0 %v602
        %1195 = vmatmul.mubr.f32.gmra.mxu0 %v601
        %v1196 = vpop.f32.mrf.mxu0
        %v1197 = vadd.f32 %v1090, %v1196
        %v1198 = vpop.f32.mrf.mxu0
        %v1199 = vadd.f32 %v1092, %v1198
        %1200 = vmatprep.mubr.f32.mxu0 %v617
        %1201 = vmatmul.mubr.f32.gmra.mxu0 %v616
        %v1202 = vpop.f32.mrf.mxu0
        %v1203 = vadd.f32 %v1096, %v1202
        %v1204 = vpop.f32.mrf.mxu0
        %v1205 = vadd.f32 %v1098, %v1204
        %1206 = vdwg.mxu0
        %1207 = vmatprep.subr.mxu0 %v859
        %1208 = vmatpush1.xpose.msra.mxu0 %v858
        %1209 = vmatprep.subr.mxu0 %v844
        %1210 = vmatpush1.xpose.msra.mxu0 %v843
        %1211 = vmatprep.subr.mxu0 %v829
        %1212 = vmatpush1.xpose.msra.mxu0 %v828
        %1213 = vmatprep.subr.mxu0 %v814
        %1214 = vmatpush1.xpose.msra.mxu0 %v813
        %1215 = vmatprep.subr.mxu0 %v799
        %1216 = vmatpush1.xpose.msra.mxu0 %v798
        %1217 = vmatprep.subr.mxu0 %v784
        %1218 = vmatpush1.xpose.msra.mxu0 %v783
        %1219 = vmatprep.subr.mxu0 %v769
        %1220 = vmatpush1.xpose.msra.mxu0 %v768
        %1221 = vmatprep.subr.mxu0 %v754
        %1222 = vmatpush1.xpose.msra.mxu0 %v753
        %1223 = vmatprep.subr.mxu0 %v739
        %1224 = vmatpush1.xpose.msra.mxu0 %v738
        %1225 = vmatprep.subr.mxu0 %v724
        %1226 = vmatpush1.xpose.msra.mxu0 %v723
        %1227 = vmatprep.subr.mxu0 %v709
        %1228 = vmatpush1.xpose.msra.mxu0 %v708
        %1229 = vmatprep.subr.mxu0 %v694
        %1230 = vmatpush1.xpose.msra.mxu0 %v693
        %1231 = vmatprep.subr.mxu0 %v679
        %1232 = vmatpush1.xpose.msra.mxu0 %v678
        %1233 = vmatprep.subr.mxu0 %v664
        %1234 = vmatpush1.xpose.msra.mxu0 %v663
        %1235 = vmatprep.subr.mxu0 %v649
        %1236 = vmatpush1.xpose.msra.mxu0 %v648
        %1237 = vmatprep.subr.mxu0 %v634
        %1238 = vmatpush1.xpose.msra.mxu0 %v633
        %1239 = vmatprep.subr.mxu0 0.0
        %1240 = vmatpush2.xpose.msra.mxu0 0.0
        %1241 = vmatprep.subr.mxu0 0.0
        %1242 = vmatpush2.xpose.msra.mxu0 0.0
        %1243 = vmatprep.subr.mxu0 0.0
        %1244 = vmatpush2.xpose.msra.mxu0 0.0
        %1245 = vmatprep.subr.mxu0 0.0
        %1246 = vmatpush2.xpose.msra.mxu0 0.0
        %1247 = vmatprep.subr.mxu0 0.0
        %1248 = vmatpush2.xpose.msra.mxu0 0.0
        %1249 = vmatprep.subr.mxu0 0.0
        %1250 = vmatpush2.xpose.msra.mxu0 0.0
        %1251 = vmatprep.subr.mxu0 0.0
        %1252 = vmatpush2.xpose.msra.mxu0 0.0
        %1253 = vmatprep.subr.mxu0 0.0
        %1254 = vmatpush2.xpose.msra.mxu0 0.0
        %1255 = vmatprep.subr.mxu0 0.0
        %1256 = vmatpush2.xpose.msra.mxu0 0.0
        %1257 = vmatprep.subr.mxu0 0.0
        %1258 = vmatpush2.xpose.msra.mxu0 0.0
        %1259 = vmatprep.subr.mxu0 0.0
        %1260 = vmatpush2.xpose.msra.mxu0 0.0
        %1261 = vmatprep.subr.mxu0 0.0
        %1262 = vmatpush2.xpose.msra.mxu0 0.0
        %1263 = vmatprep.subr.mxu0 0.0
        %1264 = vmatpush2.xpose.msra.mxu0 0.0
        %1265 = vmatprep.subr.mxu0 %v904
        %1266 = vmatpush2.xpose.msra.mxu0 %v903
        %1267 = vmatprep.subr.mxu0 %v889
        %1268 = vmatpush2.xpose.msra.mxu0 %v888
        %1269 = vmatprep.subr.mxu0 %v874
        %1270 = vmatpush2.xpose.msra.mxu0 %v873
        %1271 = vmatprep.mubr.f32.mxu0 %v529
        %1272 = vmatmul.mubr.f32.gmra.mxu0 %v528
        %v1273 = vpop.f32.mrf.mxu0
        %v1274 = vadd.f32 %v1167, %v1273
        %v1275 = vpop.f32.mrf.mxu0
        %v1276 = vadd.f32 %v1169, %v1275
        %1277 = vmatprep.mubr.f32.mxu0 %v544
        %1278 = vmatmul.mubr.f32.gmra.mxu0 %v543
        %v1279 = vpop.f32.mrf.mxu0
        %v1280 = vadd.f32 %v1173, %v1279
        %v1281 = vpop.f32.mrf.mxu0
        %v1282 = vadd.f32 %v1175, %v1281
        %1283 = vmatprep.mubr.f32.mxu0 %v559
        %1284 = vmatmul.mubr.f32.gmra.mxu0 %v558
        %v1285 = vpop.f32.mrf.mxu0
        %v1286 = vadd.f32 %v1179, %v1285
        %v1287 = vpop.f32.mrf.mxu0
        %v1288 = vadd.f32 %v1181, %v1287
        %1289 = vmatprep.mubr.f32.mxu0 %v574
        %1290 = vmatmul.mubr.f32.gmra.mxu0 %v573
        %v1291 = vpop.f32.mrf.mxu0
        %v1292 = vadd.f32 %v1185, %v1291
        %v1293 = vpop.f32.mrf.mxu0
        %v1294 = vadd.f32 %v1187, %v1293
        %1295 = vmatprep.mubr.f32.mxu0 %v589
        %1296 = vmatmul.mubr.f32.gmra.mxu0 %v588
        %v1297 = vpop.f32.mrf.mxu0
        %v1298 = vadd.f32 %v1191, %v1297
        %v1299 = vpop.f32.mrf.mxu0
        %v1300 = vadd.f32 %v1193, %v1299
        %1301 = vmatprep.mubr.f32.mxu0 %v604
        %1302 = vmatmul.mubr.f32.gmra.mxu0 %v603
        %v1303 = vpop.f32.mrf.mxu0
        %v1304 = vadd.f32 %v1197, %v1303
        %v1305 = vpop.f32.mrf.mxu0
        %v1306 = vadd.f32 %v1199, %v1305
        %1307 = vmatprep.mubr.f32.mxu0 %v619
        %1308 = vmatmul.mubr.f32.gmra.mxu0 %v618
        %v1309 = vpop.f32.mrf.mxu0
        %v1310 = vadd.f32 %v1203, %v1309
        %v1311 = vpop.f32.mrf.mxu0
        %v1312 = vadd.f32 %v1205, %v1311
        %1313 = vdwg.mxu0
        %1314 = vmatprep.subr.mxu0 %v861
        %1315 = vmatpush1.xpose.msra.mxu0 %v860
        %1316 = vmatprep.subr.mxu0 %v846
        %1317 = vmatpush1.xpose.msra.mxu0 %v845
        %1318 = vmatprep.subr.mxu0 %v831
        %1319 = vmatpush1.xpose.msra.mxu0 %v830
        %1320 = vmatprep.subr.mxu0 %v816
        %1321 = vmatpush1.xpose.msra.mxu0 %v815
        %1322 = vmatprep.subr.mxu0 %v801
        %1323 = vmatpush1.xpose.msra.mxu0 %v800
        %1324 = vmatprep.subr.mxu0 %v786
        %1325 = vmatpush1.xpose.msra.mxu0 %v785
        %1326 = vmatprep.subr.mxu0 %v771
        %1327 = vmatpush1.xpose.msra.mxu0 %v770
        %1328 = vmatprep.subr.mxu0 %v756
        %1329 = vmatpush1.xpose.msra.mxu0 %v755
        %1330 = vmatprep.subr.mxu0 %v741
        %1331 = vmatpush1.xpose.msra.mxu0 %v740
        %1332 = vmatprep.subr.mxu0 %v726
        %1333 = vmatpush1.xpose.msra.mxu0 %v725
        %1334 = vmatprep.subr.mxu0 %v711
        %1335 = vmatpush1.xpose.msra.mxu0 %v710
        %1336 = vmatprep.subr.mxu0 %v696
        %1337 = vmatpush1.xpose.msra.mxu0 %v695
        %1338 = vmatprep.subr.mxu0 %v681
        %1339 = vmatpush1.xpose.msra.mxu0 %v680
        %1340 = vmatprep.subr.mxu0 %v666
        %1341 = vmatpush1.xpose.msra.mxu0 %v665
        %1342 = vmatprep.subr.mxu0 %v651
        %1343 = vmatpush1.xpose.msra.mxu0 %v650
        %1344 = vmatprep.subr.mxu0 %v636
        %1345 = vmatpush1.xpose.msra.mxu0 %v635
        %1346 = vmatprep.subr.mxu0 0.0
        %1347 = vmatpush2.xpose.msra.mxu0 0.0
        %1348 = vmatprep.subr.mxu0 0.0
        %1349 = vmatpush2.xpose.msra.mxu0 0.0
        %1350 = vmatprep.subr.mxu0 0.0
        %1351 = vmatpush2.xpose.msra.mxu0 0.0
        %1352 = vmatprep.subr.mxu0 0.0
        %1353 = vmatpush2.xpose.msra.mxu0 0.0
        %1354 = vmatprep.subr.mxu0 0.0
        %1355 = vmatpush2.xpose.msra.mxu0 0.0
        %1356 = vmatprep.subr.mxu0 0.0
        %1357 = vmatpush2.xpose.msra.mxu0 0.0
        %1358 = vmatprep.subr.mxu0 0.0
        %1359 = vmatpush2.xpose.msra.mxu0 0.0
        %1360 = vmatprep.subr.mxu0 0.0
        %1361 = vmatpush2.xpose.msra.mxu0 0.0
        %1362 = vmatprep.subr.mxu0 0.0
        %1363 = vmatpush2.xpose.msra.mxu0 0.0
        %1364 = vmatprep.subr.mxu0 0.0
        %1365 = vmatpush2.xpose.msra.mxu0 0.0
        %1366 = vmatprep.subr.mxu0 0.0
        %1367 = vmatpush2.xpose.msra.mxu0 0.0
        %1368 = vmatprep.subr.mxu0 0.0
        %1369 = vmatpush2.xpose.msra.mxu0 0.0
        %1370 = vmatprep.subr.mxu0 0.0
        %1371 = vmatpush2.xpose.msra.mxu0 0.0
        %1372 = vmatprep.subr.mxu0 %v906
        %1373 = vmatpush2.xpose.msra.mxu0 %v905
        %1374 = vmatprep.subr.mxu0 %v891
        %1375 = vmatpush2.xpose.msra.mxu0 %v890
        %1376 = vmatprep.subr.mxu0 %v876
        %1377 = vmatpush2.xpose.msra.mxu0 %v875
        %1378 = vmatprep.mubr.f32.mxu0 %v531
        %1379 = vmatmul.mubr.f32.gmra.mxu0 %v530
        %v1380 = vpop.f32.mrf.mxu0
        %v1381 = vadd.f32 %v1274, %v1380
        %v1382 = vpop.f32.mrf.mxu0
        %v1383 = vadd.f32 %v1276, %v1382
        %1384 = vmatprep.mubr.f32.mxu0 %v546
        %1385 = vmatmul.mubr.f32.gmra.mxu0 %v545
        %v1386 = vpop.f32.mrf.mxu0
        %v1387 = vadd.f32 %v1280, %v1386
        %v1388 = vpop.f32.mrf.mxu0
        %v1389 = vadd.f32 %v1282, %v1388
        %1390 = vmatprep.mubr.f32.mxu0 %v561
        %1391 = vmatmul.mubr.f32.gmra.mxu0 %v560
        %v1392 = vpop.f32.mrf.mxu0
        %v1393 = vadd.f32 %v1286, %v1392
        %v1394 = vpop.f32.mrf.mxu0
        %v1395 = vadd.f32 %v1288, %v1394
        %1396 = vmatprep.mubr.f32.mxu0 %v576
        %1397 = vmatmul.mubr.f32.gmra.mxu0 %v575
        %v1398 = vpop.f32.mrf.mxu0
        %v1399 = vadd.f32 %v1292, %v1398
        %v1400 = vpop.f32.mrf.mxu0
        %v1401 = vadd.f32 %v1294, %v1400
        %1402 = vmatprep.mubr.f32.mxu0 %v591
        %1403 = vmatmul.mubr.f32.gmra.mxu0 %v590
        %v1404 = vpop.f32.mrf.mxu0
        %v1405 = vadd.f32 %v1298, %v1404
        %v1406 = vpop.f32.mrf.mxu0
        %v1407 = vadd.f32 %v1300, %v1406
        %1408 = vmatprep.mubr.f32.mxu0 %v606
        %1409 = vmatmul.mubr.f32.gmra.mxu0 %v605
        %v1410 = vpop.f32.mrf.mxu0
        %v1411 = vadd.f32 %v1304, %v1410
        %v1412 = vpop.f32.mrf.mxu0
        %v1413 = vadd.f32 %v1306, %v1412
        %1414 = vmatprep.mubr.f32.mxu0 %v621
        %1415 = vmatmul.mubr.f32.gmra.mxu0 %v620
        %v1416 = vpop.f32.mrf.mxu0
        %v1417 = vadd.f32 %v1310, %v1416
        %v1418 = vpop.f32.mrf.mxu0
        %v1419 = vadd.f32 %v1312, %v1418
        %1420 = vdwg.mxu0
        %1421 = vmatprep.subr.mxu0 %v863
        %1422 = vmatpush1.xpose.msra.mxu0 %v862
        %1423 = vmatprep.subr.mxu0 %v848
        %1424 = vmatpush1.xpose.msra.mxu0 %v847
        %1425 = vmatprep.subr.mxu0 %v833
        %1426 = vmatpush1.xpose.msra.mxu0 %v832
        %1427 = vmatprep.subr.mxu0 %v818
        %1428 = vmatpush1.xpose.msra.mxu0 %v817
        %1429 = vmatprep.subr.mxu0 %v803
        %1430 = vmatpush1.xpose.msra.mxu0 %v802
        %1431 = vmatprep.subr.mxu0 %v788
        %1432 = vmatpush1.xpose.msra.mxu0 %v787
        %1433 = vmatprep.subr.mxu0 %v773
        %1434 = vmatpush1.xpose.msra.mxu0 %v772
        %1435 = vmatprep.subr.mxu0 %v758
        %1436 = vmatpush1.xpose.msra.mxu0 %v757
        %1437 = vmatprep.subr.mxu0 %v743
        %1438 = vmatpush1.xpose.msra.mxu0 %v742
        %1439 = vmatprep.subr.mxu0 %v728
        %1440 = vmatpush1.xpose.msra.mxu0 %v727
        %1441 = vmatprep.subr.mxu0 %v713
        %1442 = vmatpush1.xpose.msra.mxu0 %v712
        %1443 = vmatprep.subr.mxu0 %v698
        %1444 = vmatpush1.xpose.msra.mxu0 %v697
        %1445 = vmatprep.subr.mxu0 %v683
        %1446 = vmatpush1.xpose.msra.mxu0 %v682
        %1447 = vmatprep.subr.mxu0 %v668
        %1448 = vmatpush1.xpose.msra.mxu0 %v667
        %1449 = vmatprep.subr.mxu0 %v653
        %1450 = vmatpush1.xpose.msra.mxu0 %v652
        %1451 = vmatprep.subr.mxu0 %v638
        %1452 = vmatpush1.xpose.msra.mxu0 %v637
        %1453 = vmatprep.subr.mxu0 0.0
        %1454 = vmatpush2.xpose.msra.mxu0 0.0
        %1455 = vmatprep.subr.mxu0 0.0
        %1456 = vmatpush2.xpose.msra.mxu0 0.0
        %1457 = vmatprep.subr.mxu0 0.0
        %1458 = vmatpush2.xpose.msra.mxu0 0.0
        %1459 = vmatprep.subr.mxu0 0.0
        %1460 = vmatpush2.xpose.msra.mxu0 0.0
        %1461 = vmatprep.subr.mxu0 0.0
        %1462 = vmatpush2.xpose.msra.mxu0 0.0
        %1463 = vmatprep.subr.mxu0 0.0
        %1464 = vmatpush2.xpose.msra.mxu0 0.0
        %1465 = vmatprep.subr.mxu0 0.0
        %1466 = vmatpush2.xpose.msra.mxu0 0.0
        %1467 = vmatprep.subr.mxu0 0.0
        %1468 = vmatpush2.xpose.msra.mxu0 0.0
        %1469 = vmatprep.subr.mxu0 0.0
        %1470 = vmatpush2.xpose.msra.mxu0 0.0
        %1471 = vmatprep.subr.mxu0 0.0
        %1472 = vmatpush2.xpose.msra.mxu0 0.0
        %1473 = vmatprep.subr.mxu0 0.0
        %1474 = vmatpush2.xpose.msra.mxu0 0.0
        %1475 = vmatprep.subr.mxu0 0.0
        %1476 = vmatpush2.xpose.msra.mxu0 0.0
        %1477 = vmatprep.subr.mxu0 0.0
        %1478 = vmatpush2.xpose.msra.mxu0 0.0
        %1479 = vmatprep.subr.mxu0 %v908
        %1480 = vmatpush2.xpose.msra.mxu0 %v907
        %1481 = vmatprep.subr.mxu0 %v893
        %1482 = vmatpush2.xpose.msra.mxu0 %v892
        %1483 = vmatprep.subr.mxu0 %v878
        %1484 = vmatpush2.xpose.msra.mxu0 %v877
        %1485 = vmatprep.mubr.f32.mxu0 %v533
        %1486 = vmatmul.mubr.f32.gmra.mxu0 %v532
        %v1487 = vpop.f32.mrf.mxu0
        %v1488 = vadd.f32 %v1381, %v1487
        %v1489 = vpop.f32.mrf.mxu0
        %v1490 = vadd.f32 %v1383, %v1489
        %1491 = vmatprep.mubr.f32.mxu0 %v548
        %1492 = vmatmul.mubr.f32.gmra.mxu0 %v547
        %v1493 = vpop.f32.mrf.mxu0
        %v1494 = vadd.f32 %v1387, %v1493
        %v1495 = vpop.f32.mrf.mxu0
        %v1496 = vadd.f32 %v1389, %v1495
        %1497 = vmatprep.mubr.f32.mxu0 %v563
        %1498 = vmatmul.mubr.f32.gmra.mxu0 %v562
        %v1499 = vpop.f32.mrf.mxu0
        %v1500 = vadd.f32 %v1393, %v1499
        %v1501 = vpop.f32.mrf.mxu0
        %v1502 = vadd.f32 %v1395, %v1501
        %1503 = vmatprep.mubr.f32.mxu0 %v578
        %1504 = vmatmul.mubr.f32.gmra.mxu0 %v577
        %v1505 = vpop.f32.mrf.mxu0
        %v1506 = vadd.f32 %v1399, %v1505
        %v1507 = vpop.f32.mrf.mxu0
        %v1508 = vadd.f32 %v1401, %v1507
        %1509 = vmatprep.mubr.f32.mxu0 %v593
        %1510 = vmatmul.mubr.f32.gmra.mxu0 %v592
        %v1511 = vpop.f32.mrf.mxu0
        %v1512 = vadd.f32 %v1405, %v1511
        %v1513 = vpop.f32.mrf.mxu0
        %v1514 = vadd.f32 %v1407, %v1513
        %1515 = vmatprep.mubr.f32.mxu0 %v608
        %1516 = vmatmul.mubr.f32.gmra.mxu0 %v607
        %v1517 = vpop.f32.mrf.mxu0
        %v1518 = vadd.f32 %v1411, %v1517
        %v1519 = vpop.f32.mrf.mxu0
        %v1520 = vadd.f32 %v1413, %v1519
        %1521 = vmatprep.mubr.f32.mxu0 %v623
        %1522 = vmatmul.mubr.f32.gmra.mxu0 %v622
        %v1523 = vpop.f32.mrf.mxu0
        %v1524 = vadd.f32 %v1417, %v1523
        %v1525 = vpop.f32.mrf.mxu0
        %v1526 = vadd.f32 %v1419, %v1525
        %1527 = vdwg.mxu0
        %1528 = vmatprep.subr.mxu0 %v865
        %1529 = vmatpush1.xpose.msra.mxu0 %v864
        %1530 = vmatprep.subr.mxu0 %v850
        %1531 = vmatpush1.xpose.msra.mxu0 %v849
        %1532 = vmatprep.subr.mxu0 %v835
        %1533 = vmatpush1.xpose.msra.mxu0 %v834
        %1534 = vmatprep.subr.mxu0 %v820
        %1535 = vmatpush1.xpose.msra.mxu0 %v819
        %1536 = vmatprep.subr.mxu0 %v805
        %1537 = vmatpush1.xpose.msra.mxu0 %v804
        %1538 = vmatprep.subr.mxu0 %v790
        %1539 = vmatpush1.xpose.msra.mxu0 %v789
        %1540 = vmatprep.subr.mxu0 %v775
        %1541 = vmatpush1.xpose.msra.mxu0 %v774
        %1542 = vmatprep.subr.mxu0 %v760
        %1543 = vmatpush1.xpose.msra.mxu0 %v759
        %1544 = vmatprep.subr.mxu0 %v745
        %1545 = vmatpush1.xpose.msra.mxu0 %v744
        %1546 = vmatprep.subr.mxu0 %v730
        %1547 = vmatpush1.xpose.msra.mxu0 %v729
        %1548 = vmatprep.subr.mxu0 %v715
        %1549 = vmatpush1.xpose.msra.mxu0 %v714
        %1550 = vmatprep.subr.mxu0 %v700
        %1551 = vmatpush1.xpose.msra.mxu0 %v699
        %1552 = vmatprep.subr.mxu0 %v685
        %1553 = vmatpush1.xpose.msra.mxu0 %v684
        %1554 = vmatprep.subr.mxu0 %v670
        %1555 = vmatpush1.xpose.msra.mxu0 %v669
        %1556 = vmatprep.subr.mxu0 %v655
        %1557 = vmatpush1.xpose.msra.mxu0 %v654
        %1558 = vmatprep.subr.mxu0 %v640
        %1559 = vmatpush1.xpose.msra.mxu0 %v639
        %1560 = vmatprep.subr.mxu0 0.0
        %1561 = vmatpush2.xpose.msra.mxu0 0.0
        %1562 = vmatprep.subr.mxu0 0.0
        %1563 = vmatpush2.xpose.msra.mxu0 0.0
        %1564 = vmatprep.subr.mxu0 0.0
        %1565 = vmatpush2.xpose.msra.mxu0 0.0
        %1566 = vmatprep.subr.mxu0 0.0
        %1567 = vmatpush2.xpose.msra.mxu0 0.0
        %1568 = vmatprep.subr.mxu0 0.0
        %1569 = vmatpush2.xpose.msra.mxu0 0.0
        %1570 = vmatprep.subr.mxu0 0.0
        %1571 = vmatpush2.xpose.msra.mxu0 0.0
        %1572 = vmatprep.subr.mxu0 0.0
        %1573 = vmatpush2.xpose.msra.mxu0 0.0
        %1574 = vmatprep.subr.mxu0 0.0
        %1575 = vmatpush2.xpose.msra.mxu0 0.0
        %1576 = vmatprep.subr.mxu0 0.0
        %1577 = vmatpush2.xpose.msra.mxu0 0.0
        %1578 = vmatprep.subr.mxu0 0.0
        %1579 = vmatpush2.xpose.msra.mxu0 0.0
        %1580 = vmatprep.subr.mxu0 0.0
        %1581 = vmatpush2.xpose.msra.mxu0 0.0
        %1582 = vmatprep.subr.mxu0 0.0
        %1583 = vmatpush2.xpose.msra.mxu0 0.0
        %1584 = vmatprep.subr.mxu0 0.0
        %1585 = vmatpush2.xpose.msra.mxu0 0.0
        %1586 = vmatprep.subr.mxu0 %v910
        %1587 = vmatpush2.xpose.msra.mxu0 %v909
        %1588 = vmatprep.subr.mxu0 %v895
        %1589 = vmatpush2.xpose.msra.mxu0 %v894
        %1590 = vmatprep.subr.mxu0 %v880
        %1591 = vmatpush2.xpose.msra.mxu0 %v879
        %1592 = vmatprep.mubr.f32.mxu0 %v535
        %1593 = vmatmul.mubr.f32.gmra.mxu0 %v534
        %v1594 = vpop.f32.mrf.mxu0
        %v1595 = vadd.f32 %v1488, %v1594
        %v1596 = vpop.f32.mrf.mxu0
        %v1597 = vadd.f32 %v1490, %v1596
        %1598 = vmatprep.mubr.f32.mxu0 %v550
        %1599 = vmatmul.mubr.f32.gmra.mxu0 %v549
        %v1600 = vpop.f32.mrf.mxu0
        %v1601 = vadd.f32 %v1494, %v1600
        %v1602 = vpop.f32.mrf.mxu0
        %v1603 = vadd.f32 %v1496, %v1602
        %1604 = vmatprep.mubr.f32.mxu0 %v565
        %1605 = vmatmul.mubr.f32.gmra.mxu0 %v564
        %v1606 = vpop.f32.mrf.mxu0
        %v1607 = vadd.f32 %v1500, %v1606
        %v1608 = vpop.f32.mrf.mxu0
        %v1609 = vadd.f32 %v1502, %v1608
        %1610 = vmatprep.mubr.f32.mxu0 %v580
        %1611 = vmatmul.mubr.f32.gmra.mxu0 %v579
        %v1612 = vpop.f32.mrf.mxu0
        %v1613 = vadd.f32 %v1506, %v1612
        %v1614 = vpop.f32.mrf.mxu0
        %v1615 = vadd.f32 %v1508, %v1614
        %1616 = vmatprep.mubr.f32.mxu0 %v595
        %1617 = vmatmul.mubr.f32.gmra.mxu0 %v594
        %v1618 = vpop.f32.mrf.mxu0
        %v1619 = vadd.f32 %v1512, %v1618
        %v1620 = vpop.f32.mrf.mxu0
        %v1621 = vadd.f32 %v1514, %v1620
        %1622 = vmatprep.mubr.f32.mxu0 %v610
        %1623 = vmatmul.mubr.f32.gmra.mxu0 %v609
        %v1624 = vpop.f32.mrf.mxu0
        %v1625 = vadd.f32 %v1518, %v1624
        %v1626 = vpop.f32.mrf.mxu0
        %v1627 = vadd.f32 %v1520, %v1626
        %1628 = vmatprep.mubr.f32.mxu0 %v625
        %1629 = vmatmul.mubr.f32.gmra.mxu0 %v624
        %v1630 = vpop.f32.mrf.mxu0
        %v1631 = vadd.f32 %v1524, %v1630
        %v1632 = vpop.f32.mrf.mxu0
        %v1633 = vadd.f32 %v1526, %v1632
        %1634 = vdwg.mxu0
        %1635 = vmatprep.subr.mxu0 %v867
        %1636 = vmatpush1.xpose.msra.mxu0 %v866
        %1637 = vmatprep.subr.mxu0 %v852
        %1638 = vmatpush1.xpose.msra.mxu0 %v851
        %1639 = vmatprep.subr.mxu0 %v837
        %1640 = vmatpush1.xpose.msra.mxu0 %v836
        %1641 = vmatprep.subr.mxu0 %v822
        %1642 = vmatpush1.xpose.msra.mxu0 %v821
        %1643 = vmatprep.subr.mxu0 %v807
        %1644 = vmatpush1.xpose.msra.mxu0 %v806
        %1645 = vmatprep.subr.mxu0 %v792
        %1646 = vmatpush1.xpose.msra.mxu0 %v791
        %1647 = vmatprep.subr.mxu0 %v777
        %1648 = vmatpush1.xpose.msra.mxu0 %v776
        %1649 = vmatprep.subr.mxu0 %v762
        %1650 = vmatpush1.xpose.msra.mxu0 %v761
        %1651 = vmatprep.subr.mxu0 %v747
        %1652 = vmatpush1.xpose.msra.mxu0 %v746
        %1653 = vmatprep.subr.mxu0 %v732
        %1654 = vmatpush1.xpose.msra.mxu0 %v731
        %1655 = vmatprep.subr.mxu0 %v717
        %1656 = vmatpush1.xpose.msra.mxu0 %v716
        %1657 = vmatprep.subr.mxu0 %v702
        %1658 = vmatpush1.xpose.msra.mxu0 %v701
        %1659 = vmatprep.subr.mxu0 %v687
        %1660 = vmatpush1.xpose.msra.mxu0 %v686
        %1661 = vmatprep.subr.mxu0 %v672
        %1662 = vmatpush1.xpose.msra.mxu0 %v671
        %1663 = vmatprep.subr.mxu0 %v657
        %1664 = vmatpush1.xpose.msra.mxu0 %v656
        %1665 = vmatprep.subr.mxu0 %v642
        %1666 = vmatpush1.xpose.msra.mxu0 %v641
        %1667 = vmatprep.subr.mxu0 0.0
        %1668 = vmatpush2.xpose.msra.mxu0 0.0
        %1669 = vmatprep.subr.mxu0 0.0
        %1670 = vmatpush2.xpose.msra.mxu0 0.0
        %1671 = vmatprep.subr.mxu0 0.0
        %1672 = vmatpush2.xpose.msra.mxu0 0.0
        %1673 = vmatprep.subr.mxu0 0.0
        %1674 = vmatpush2.xpose.msra.mxu0 0.0
        %1675 = vmatprep.subr.mxu0 0.0
        %1676 = vmatpush2.xpose.msra.mxu0 0.0
        %1677 = vmatprep.subr.mxu0 0.0
        %1678 = vmatpush2.xpose.msra.mxu0 0.0
        %1679 = vmatprep.subr.mxu0 0.0
        %1680 = vmatpush2.xpose.msra.mxu0 0.0
        %1681 = vmatprep.subr.mxu0 0.0
        %1682 = vmatpush2.xpose.msra.mxu0 0.0
        %1683 = vmatprep.subr.mxu0 0.0
        %1684 = vmatpush2.xpose.msra.mxu0 0.0
        %1685 = vmatprep.subr.mxu0 0.0
        %1686 = vmatpush2.xpose.msra.mxu0 0.0
        %1687 = vmatprep.subr.mxu0 0.0
        %1688 = vmatpush2.xpose.msra.mxu0 0.0
        %1689 = vmatprep.subr.mxu0 0.0
        %1690 = vmatpush2.xpose.msra.mxu0 0.0
        %1691 = vmatprep.subr.mxu0 0.0
        %1692 = vmatpush2.xpose.msra.mxu0 0.0
        %1693 = vmatprep.subr.mxu0 %v912
        %1694 = vmatpush2.xpose.msra.mxu0 %v911
        %1695 = vmatprep.subr.mxu0 %v897
        %1696 = vmatpush2.xpose.msra.mxu0 %v896
        %1697 = vmatprep.subr.mxu0 %v882
        %1698 = vmatpush2.xpose.msra.mxu0 %v881
        %1699 = vmatprep.mubr.f32.mxu0 %v537
        %1700 = vmatmul.mubr.f32.gmra.mxu0 %v536
        %v1701 = vpop.f32.mrf.mxu0
        %v1702 = vadd.f32 %v1595, %v1701
        %v1703 = vpop.f32.mrf.mxu0
        %v1704 = vadd.f32 %v1597, %v1703
        %1705 = vmatprep.mubr.f32.mxu0 %v552
        %1706 = vmatmul.mubr.f32.gmra.mxu0 %v551
        %v1707 = vpop.f32.mrf.mxu0
        %v1708 = vadd.f32 %v1601, %v1707
        %v1709 = vpop.f32.mrf.mxu0
        %v1710 = vadd.f32 %v1603, %v1709
        %1711 = vmatprep.mubr.f32.mxu0 %v567
        %1712 = vmatmul.mubr.f32.gmra.mxu0 %v566
        %v1713 = vpop.f32.mrf.mxu0
        %v1714 = vadd.f32 %v1607, %v1713
        %v1715 = vpop.f32.mrf.mxu0
        %v1716 = vadd.f32 %v1609, %v1715
        %1717 = vmatprep.mubr.f32.mxu0 %v582
        %1718 = vmatmul.mubr.f32.gmra.mxu0 %v581
        %v1719 = vpop.f32.mrf.mxu0
        %v1720 = vadd.f32 %v1613, %v1719
        %v1721 = vpop.f32.mrf.mxu0
        %v1722 = vadd.f32 %v1615, %v1721
        %1723 = vmatprep.mubr.f32.mxu0 %v597
        %1724 = vmatmul.mubr.f32.gmra.mxu0 %v596
        %v1725 = vpop.f32.mrf.mxu0
        %v1726 = vadd.f32 %v1619, %v1725
        %v1727 = vpop.f32.mrf.mxu0
        %v1728 = vadd.f32 %v1621, %v1727
        %1729 = vmatprep.mubr.f32.mxu0 %v612
        %1730 = vmatmul.mubr.f32.gmra.mxu0 %v611
        %v1731 = vpop.f32.mrf.mxu0
        %v1732 = vadd.f32 %v1625, %v1731
        %v1733 = vpop.f32.mrf.mxu0
        %v1734 = vadd.f32 %v1627, %v1733
        %1735 = vmatprep.mubr.f32.mxu0 %v627
        %1736 = vmatmul.mubr.f32.gmra.mxu0 %v626
        %v1737 = vpop.f32.mrf.mxu0
        %v1738 = vadd.f32 %v1631, %v1737
        %v1739 = vpop.f32.mrf.mxu0
        %v1740 = vadd.f32 %v1633, %v1739
        %1741 = vdwg.mxu0
        %1742 = vmatprep.subr.mxu0 0.0
        %1743 = vmatpush1.xpose.msra.mxu0 %v982
        %1744 = vmatprep.subr.mxu0 0.0
        %1745 = vmatpush1.xpose.msra.mxu0 %v979
        %1746 = vmatprep.subr.mxu0 0.0
        %1747 = vmatpush1.xpose.msra.mxu0 %v976
        %1748 = vmatprep.subr.mxu0 0.0
        %1749 = vmatpush1.xpose.msra.mxu0 %v973
        %1750 = vmatprep.subr.mxu0 0.0
        %1751 = vmatpush1.xpose.msra.mxu0 %v970
        %1752 = vmatprep.subr.mxu0 0.0
        %1753 = vmatpush1.xpose.msra.mxu0 %v967
        %1754 = vmatprep.subr.mxu0 0.0
        %1755 = vmatpush1.xpose.msra.mxu0 %v964
        %1756 = vmatprep.subr.mxu0 0.0
        %1757 = vmatpush1.xpose.msra.mxu0 %v961
        %1758 = vmatprep.subr.mxu0 0.0
        %1759 = vmatpush1.xpose.msra.mxu0 %v958
        %1760 = vmatprep.subr.mxu0 0.0
        %1761 = vmatpush1.xpose.msra.mxu0 %v955
        %1762 = vmatprep.subr.mxu0 0.0
        %1763 = vmatpush1.xpose.msra.mxu0 %v952
        %1764 = vmatprep.subr.mxu0 0.0
        %1765 = vmatpush1.xpose.msra.mxu0 %v949
        %1766 = vmatprep.subr.mxu0 0.0
        %1767 = vmatpush1.xpose.msra.mxu0 %v946
        %1768 = vmatprep.subr.mxu0 0.0
        %1769 = vmatpush1.xpose.msra.mxu0 %v943
        %1770 = vmatprep.subr.mxu0 0.0
        %1771 = vmatpush1.xpose.msra.mxu0 %v940
        %1772 = vmatprep.subr.mxu0 0.0
        %1773 = vmatpush1.xpose.msra.mxu0 %v937
        %1774 = vmatprep.subr.mxu0 0.0
        %1775 = vmatpush2.xpose.msra.mxu0 0.0
        %1776 = vmatprep.subr.mxu0 0.0
        %1777 = vmatpush2.xpose.msra.mxu0 0.0
        %1778 = vmatprep.subr.mxu0 0.0
        %1779 = vmatpush2.xpose.msra.mxu0 0.0
        %1780 = vmatprep.subr.mxu0 0.0
        %1781 = vmatpush2.xpose.msra.mxu0 0.0
        %1782 = vmatprep.subr.mxu0 0.0
        %1783 = vmatpush2.xpose.msra.mxu0 0.0
        %1784 = vmatprep.subr.mxu0 0.0
        %1785 = vmatpush2.xpose.msra.mxu0 0.0
        %1786 = vmatprep.subr.mxu0 0.0
        %1787 = vmatpush2.xpose.msra.mxu0 0.0
        %1788 = vmatprep.subr.mxu0 0.0
        %1789 = vmatpush2.xpose.msra.mxu0 0.0
        %1790 = vmatprep.subr.mxu0 0.0
        %1791 = vmatpush2.xpose.msra.mxu0 0.0
        %1792 = vmatprep.subr.mxu0 0.0
        %1793 = vmatpush2.xpose.msra.mxu0 0.0
        %1794 = vmatprep.subr.mxu0 0.0
        %1795 = vmatpush2.xpose.msra.mxu0 0.0
        %1796 = vmatprep.subr.mxu0 0.0
        %1797 = vmatpush2.xpose.msra.mxu0 0.0
        %1798 = vmatprep.subr.mxu0 0.0
        %1799 = vmatpush2.xpose.msra.mxu0 0.0
        %1800 = vmatprep.subr.mxu0 0.0
        %1801 = vmatpush2.xpose.msra.mxu0 %v991
        %1802 = vmatprep.subr.mxu0 0.0
        %1803 = vmatpush2.xpose.msra.mxu0 %v988
        %1804 = vmatprep.subr.mxu0 0.0
        %1805 = vmatpush2.xpose.msra.mxu0 %v985
        %1806 = vmatprep.mubr.f32.mxu0 0.0
        %1807 = vmatmul.mubr.f32.gmra.mxu0 %v916
        %v1808 = vpop.f32.mrf.mxu0
        %v1809 = vadd.f32 %v1702, %v1808
        %v1810 = vpop.f32.mrf.mxu0
        %v1811 = vadd.f32 %v1704, %v1810
        %1812 = vmatprep.mubr.f32.mxu0 0.0
        %1813 = vmatmul.mubr.f32.gmra.mxu0 %v919
        %v1814 = vpop.f32.mrf.mxu0
        %v1815 = vadd.f32 %v1708, %v1814
        %v1816 = vpop.f32.mrf.mxu0
        %v1817 = vadd.f32 %v1710, %v1816
        %1818 = vmatprep.mubr.f32.mxu0 0.0
        %1819 = vmatmul.mubr.f32.gmra.mxu0 %v922
        %v1820 = vpop.f32.mrf.mxu0
        %v1821 = vadd.f32 %v1714, %v1820
        %v1822 = vpop.f32.mrf.mxu0
        %v1823 = vadd.f32 %v1716, %v1822
        %1824 = vmatprep.mubr.f32.mxu0 0.0
        %1825 = vmatmul.mubr.f32.gmra.mxu0 %v925
        %v1826 = vpop.f32.mrf.mxu0
        %v1827 = vadd.f32 %v1720, %v1826
        %v1828 = vpop.f32.mrf.mxu0
        %v1829 = vadd.f32 %v1722, %v1828
        %1830 = vmatprep.mubr.f32.mxu0 0.0
        %1831 = vmatmul.mubr.f32.gmra.mxu0 %v928
        %v1832 = vpop.f32.mrf.mxu0
        %v1833 = vadd.f32 %v1726, %v1832
        %v1834 = vpop.f32.mrf.mxu0
        %v1835 = vadd.f32 %v1728, %v1834
        %1836 = vmatprep.mubr.f32.mxu0 0.0
        %1837 = vmatmul.mubr.f32.gmra.mxu0 %v931
        %v1838 = vpop.f32.mrf.mxu0
        %v1839 = vadd.f32 %v1732, %v1838
        %v1840 = vpop.f32.mrf.mxu0
        %v1841 = vadd.f32 %v1734, %v1840
        %1842 = vmatprep.mubr.f32.mxu0 0.0
        %1843 = vmatmul.mubr.f32.gmra.mxu0 %v934
        %v1844 = vpop.f32.mrf.mxu0
        %v1845 = vadd.f32 %v1738, %v1844
        %v1846 = vpop.f32.mrf.mxu0
        %v1847 = vadd.f32 %v1740, %v1846
        %1848 = vdwg.mxu0
        %v1849 = vadd.f32 %v1809, %v1815
        %v1850 = vadd.f32 %v1849, %v1821
        %v1851 = vadd.f32 %v1850, %v1827
        %v1852 = vadd.f32 %v1851, %v1833
        %v1853 = vadd.f32 %v1852, %v1839
        %vm1854 = vcmask 1040384
        %v1855 = vsel %vm1854, %v1845, 0.0
        %v1856 = vadd.f32 %v1853, %v1855
        %v1857 = vrot.slane %v1856, 4
        %v1858 = vadd.f32 %v1856, %v1857
        %v1859 = vrot.slane %v1858, 2
        %v1860 = vadd.f32 %v1858, %v1859
        %v1861 = vrot.slane %v1860, 1
        %v1862 = vadd.f32 %v1860, %v1861
        %vm1863 = vcmask 195584
        %v1864 = vsel %vm1863, %v1811, 0.0
        %v1865 = vsel %vm1863, %v1817, 0.0
        %v1866 = vadd.f32 %v1864, %v1865
        %v1867 = vsel %vm1863, %v1823, 0.0
        %v1868 = vadd.f32 %v1866, %v1867
        %v1869 = vsel %vm1863, %v1829, 0.0
        %v1870 = vadd.f32 %v1868, %v1869
        %v1871 = vsel %vm1863, %v1835, 0.0
        %v1872 = vadd.f32 %v1870, %v1871
        %v1873 = vsel %vm1863, %v1841, 0.0
        %v1874 = vadd.f32 %v1872, %v1873
        %vm1875 = vcmask 188416
        %v1876 = vsel %vm1875, %v1847, 0.0
        %v1877 = vadd.f32 %v1874, %v1876
        %v1878 = vrot.slane %v1877, 4
        %v1879 = vadd.f32 %v1877, %v1878
        %v1880 = vrot.slane %v1879, 2
        %v1881 = vadd.f32 %v1879, %v1880
        %v1882 = vrot.slane %v1881, 1
        %v1883 = vadd.f32 %v1881, %v1882
        %v1884 = vmul.f32 %v1862, 0.020408163
        %v1885 = vmul.f32 %v1883, 0.020408163
        %v1886 = vsub.f32 %v1809, %v1884
        %v1887 = vsub.f32 %v1811, %v1885
        %v1888 = vsub.f32 %v1815, %v1884
        %v1889 = vsub.f32 %v1817, %v1885
        %v1890 = vsub.f32 %v1821, %v1884
        %v1891 = vsub.f32 %v1823, %v1885
        %v1892 = vsub.f32 %v1827, %v1884
        %v1893 = vsub.f32 %v1829, %v1885
        %v1894 = vsub.f32 %v1833, %v1884
        %v1895 = vsub.f32 %v1835, %v1885
        %v1896 = vsub.f32 %v1839, %v1884
        %v1897 = vsub.f32 %v1841, %v1885
        %v1898 = vsub.f32 %v1845, %v1884
        %v1899 = vsub.f32 %v1847, %v1885
        %v1900 = vmul.f32 %v1886, %v1886
        %v1901 = vmul.f32 %v1887, %v1887
        %v1902 = vmul.f32 %v1888, %v1888
        %v1903 = vmul.f32 %v1889, %v1889
        %v1904 = vmul.f32 %v1890, %v1890
        %v1905 = vmul.f32 %v1891, %v1891
        %v1906 = vmul.f32 %v1892, %v1892
        %v1907 = vmul.f32 %v1893, %v1893
        %v1908 = vmul.f32 %v1894, %v1894
        %v1909 = vmul.f32 %v1895, %v1895
        %v1910 = vmul.f32 %v1896, %v1896
        %v1911 = vmul.f32 %v1897, %v1897
        %v1912 = vmul.f32 %v1898, %v1898
        %v1913 = vmul.f32 %v1899, %v1899
        %v1914 = vadd.f32 %v1900, %v1902
        %v1915 = vadd.f32 %v1914, %v1904
        %v1916 = vadd.f32 %v1915, %v1906
        %v1917 = vadd.f32 %v1916, %v1908
        %v1918 = vadd.f32 %v1917, %v1910
        %v1919 = vsel %vm1854, %v1912, 0.0
        %v1920 = vadd.f32 %v1918, %v1919
        %v1921 = vrot.slane %v1920, 4
        %v1922 = vadd.f32 %v1920, %v1921
        %v1923 = vrot.slane %v1922, 2
        %v1924 = vadd.f32 %v1922, %v1923
        %v1925 = vrot.slane %v1924, 1
        %v1926 = vadd.f32 %v1924, %v1925
        %v1927 = vsel %vm1863, %v1901, 0.0
        %v1928 = vsel %vm1863, %v1903, 0.0
        %v1929 = vadd.f32 %v1927, %v1928
        %v1930 = vsel %vm1863, %v1905, 0.0
        %v1931 = vadd.f32 %v1929, %v1930
        %v1932 = vsel %vm1863, %v1907, 0.0
        %v1933 = vadd.f32 %v1931, %v1932
        %v1934 = vsel %vm1863, %v1909, 0.0
        %v1935 = vadd.f32 %v1933, %v1934
        %v1936 = vsel %vm1863, %v1911, 0.0
        %v1937 = vadd.f32 %v1935, %v1936
        %v1938 = vsel %vm1875, %v1913, 0.0
        %v1939 = vadd.f32 %v1937, %v1938
        %v1940 = vrot.slane %v1939, 4
        %v1941 = vadd.f32 %v1939, %v1940
        %v1942 = vrot.slane %v1941, 2
        %v1943 = vadd.f32 %v1941, %v1942
        %v1944 = vrot.slane %v1943, 1
        %v1945 = vadd.f32 %v1943, %v1944
        %v1946 = vmul.f32 %v1926, 0.020408163
        %v1947 = vmul.f32 %v1945, 0.020408163
        %v1948 = vld [vmem:[%s289] sm:$0x3]
        %v1949 = vadd.f32 %v1946, 0.001
        %v1950 = vadd.f32 %v1947, 0.001
        %v1951 = vrsqrt.pop %v1949
        %v1952 = vrsqrt.pop %v1950
        %v1955 = vcombine.low %v1951, %v1952
        %v1957 = vunpack.c.l.s4 1966171168
        %v1958 = vunpack.c.0.s8 %v1957
        %v1959 = vlaneseq
        %v1960 = vshrl.u32 %v1959, 7
        %v1961 = vsub.s32 %v1958, %v1960
        %v1962 = vrot.slane %v1955, %v1961
        %v1964 = vunpack.c.l.s4 1966171168
        %v1965 = vunpack.c.0.s8 %v1964
        %v1966 = vlaneseq
        %v1967 = vshrl.u32 %v1966, 7
        %v1968 = vsub.s32 %v1965, %v1967
        %v1969 = vrot.slane %v1962, %v1968
        %v1971 = vmul.f32 %v1948, %v1969
        %v1972 = vld [vmem:[%s298] sm:$0x3]
        %v1974 = vlaneseq
        %v1975 = vshrl.u32 %v1974, 7
        %v1976 = vsub.s32 0, %v1975
        %v1977 = vrot.slane %v1971, %v1976
        %v1978 = vlaneseq
        %v1979 = vshrl.u32 %v1978, 7
        %v1980 = vsub.s32 1, %v1979
        %v1981 = vrot.slane %v1971, %v1980
        %v1984 = vmul.f32 %v1884, %v1977
        %v1985 = vmul.f32 %v1885, %v1981
        %v1988 = vcombine.low %v1984, %v1985
        %v1990 = vunpack.c.l.s4 1966171168
        %v1991 = vunpack.c.0.s8 %v1990
        %v1992 = vlaneseq
        %v1993 = vshrl.u32 %v1992, 7
        %v1994 = vsub.s32 %v1991, %v1993
        %v1995 = vrot.slane %v1988, %v1994
        %v1997 = vunpack.c.l.s4 1966171168
        %v1998 = vunpack.c.0.s8 %v1997
        %v1999 = vlaneseq
        %v2000 = vshrl.u32 %v1999, 7
        %v2001 = vsub.s32 %v1998, %v2000
        %v2002 = vrot.slane %v1995, %v2001
        %v2004 = vsub.f32 %v1972, %v2002
        %v2005 = vmul.f32 %v1809, %v1977
        %v2006 = vmul.f32 %v1811, %v1981
        %v2007 = vmul.f32 %v1815, %v1977
        %v2008 = vmul.f32 %v1817, %v1981
        %v2009 = vmul.f32 %v1821, %v1977
        %v2010 = vmul.f32 %v1823, %v1981
        %v2011 = vmul.f32 %v1827, %v1977
        %v2012 = vmul.f32 %v1829, %v1981
        %v2013 = vmul.f32 %v1833, %v1977
        %v2014 = vmul.f32 %v1835, %v1981
        %v2015 = vmul.f32 %v1839, %v1977
        %v2016 = vmul.f32 %v1841, %v1981
        %v2017 = vmul.f32 %v1845, %v1977
        %v2018 = vmul.f32 %v1847, %v1981
        %v2020 = vlaneseq
        %v2021 = vshrl.u32 %v2020, 7
        %v2022 = vsub.s32 0, %v2021
        %v2023 = vrot.slane %v2004, %v2022
        %v2024 = vlaneseq
        %v2025 = vshrl.u32 %v2024, 7
        %v2026 = vsub.s32 1, %v2025
        %v2027 = vrot.slane %v2004, %v2026
        %v2030 = vadd.f32 %v2005, %v2023
        %v2031 = vadd.f32 %v2006, %v2027
        %v2032 = vadd.f32 %v2007, %v2023
        %v2033 = vadd.f32 %v2008, %v2027
        %v2034 = vadd.f32 %v2009, %v2023
        %v2035 = vadd.f32 %v2010, %v2027
        %v2036 = vadd.f32 %v2011, %v2023
        %v2037 = vadd.f32 %v2012, %v2027
        %v2038 = vadd.f32 %v2013, %v2023
        %v2039 = vadd.f32 %v2014, %v2027
        %v2040 = vadd.f32 %v2015, %v2023
        %v2041 = vadd.f32 %v2016, %v2027
        %v2042 = vadd.f32 %v2017, %v2023
        %v2043 = vadd.f32 %v2018, %v2027
        %2044 = vst [vmem:[%s339] sm:$0xff] %v2030
        %2045 = vst.msk [vmem:[%s339 + $0x8] sm:$0xff] %vm1863, %v2031
        %2046 = vst [vmem:[%s339 + $0x10] sm:$0xff] %v2032
        %2047 = vst.msk [vmem:[%s339 + $0x18] sm:$0xff] %vm1863, %v2033
        %2048 = vst [vmem:[%s339 + $0x20] sm:$0xff] %v2034
        %2049 = vst.msk [vmem:[%s339 + $0x28] sm:$0xff] %vm1863, %v2035
        %2050 = vst [vmem:[%s339 + $0x30] sm:$0xff] %v2036
        %2051 = vst.msk [vmem:[%s339 + $0x38] sm:$0xff] %vm1863, %v2037
        %2052 = vst [vmem:[%s339 + $0x40] sm:$0xff] %v2038
        %2053 = vst.msk [vmem:[%s339 + $0x48] sm:$0xff] %vm1863, %v2039
        %2054 = vst [vmem:[%s339 + $0x50] sm:$0xff] %v2040
        %2055 = vst.msk [vmem:[%s339 + $0x58] sm:$0xff] %vm1863, %v2041
        %2056 = vst [vmem:[%s339 + $0x60] sm:$0x1] %v2042
        %2057 = vst.msk [vmem:[%s339 + $0x68] sm:$0x1] %vm1875, %v2043
        %p2058 = scmp.lt.s32.totalorder %s18, 1
        %s2059 = scalar_select %p2058, %s18, 1
        %s2060 = smul.addr %s2059, 14
        %s2061 = smul.addr %s2060, 8
        %s2062 = scalar_lea.vmem %s5, %s2061
        // Predicated region
        $region61: #{tpu_custom_call.1} parent=39 // pred_check
          %p2063 = pneg %p156
        $region62: #{tpu_custom_call.1} parent=39 // pred_check_branch
          %2065 = sbr.rel (%p2063) target = $region64
        $region63: #{tpu_custom_call.1} parent=39 // pred_region
          _
        $region64: #{tpu_custom_call.1} parent=39 // pred_fallthru
          _
      $region40: #{tpu_custom_call.1} parent=5 // pred_fallthru
        _
      %p2066 = scmp.le.s32.totalorder 2, %s13
      // Predicated region
      $region65: #{tpu_custom_call.1} parent=5 // pred_check
        %p2067 = pneg %p2066
      $region66: #{tpu_custom_call.1} parent=5 // pred_check_branch
        %2069 = sbr.rel (%p2067) target = $region68
      $region67: #{tpu_custom_call.1} parent=5 // pred_region
        %s2070 = ssub.s32 %s13, 2
        // Predicated region
        $region69: #{tpu_custom_call.1} parent=67 // pred_check
          %p2071 = pneg %p162
        $region70: #{tpu_custom_call.1} parent=67 // pred_check_branch
          %2073 = sbr.rel (%p2071) target = $region72
        $region71: #{tpu_custom_call.1} parent=67 // pred_region
          %p2074 = scmp.lt.s32.totalorder %s19, 1
          %s2075 = scalar_select %p2074, %s19, 1
          %s2076 = smul.addr %s2075, 14
          %s2077 = smul.addr %s2076, 8
          %s2078 = scalar_lea.vmem %s5, %s2077
        $region72: #{tpu_custom_call.1} parent=67 // pred_fallthru
          _
      $region68: #{tpu_custom_call.1} parent=5 // pred_fallthru
        _
    $region6: #{tpu_custom_call.1} parent=1 // loop_footer
      %s17 = sadd.s32 1, %s13
    $region7: #{tpu_custom_call.1} parent=1 // loop_footer_branch
      %12 = sbr.rel target = $region3
    $region8: #{tpu_custom_call.1} parent=1 // loop_exit
      _
    %2079 = vsyncpa [#allocation3], 1
    %s2080 = scalar_lea.sflag [#allocation3], 1
    %2081 = vsyncpa %s2080, 1
    %2082 = vsyncpa [#allocation5], 1

</llo_original>
